<compile_context>
chip_gen: v7x
topology: tpu7x:2x2x1
jax: 0.10.0
libtpu: 0.0.40
codegen_flags: <defaults>
</compile_context>

<pallas_src>
from functools import partial

import jax
import jax.numpy as jnp
from jax.experimental import pallas as pl
from jax.experimental.pallas import tpu as pltpu


def _round_up(x, m):
    return ((x + m - 1) // m) * m


_VMEM_LIMIT_CACHE = [False, None]


def _vmem_limit_bytes():
    """3/4 of physical VMEM for this generation, or None (compiler default)."""
    if not _VMEM_LIMIT_CACHE[0]:
        _VMEM_LIMIT_CACHE[0] = True
        try:
            cap = int(pltpu.get_tpu_info().vmem_capacity_bytes)
            _VMEM_LIMIT_CACHE[1] = max(32 << 20, (3 * cap) // 4)
        except Exception:
            _VMEM_LIMIT_CACHE[1] = None
    return _VMEM_LIMIT_CACHE[1]


def _compiler_params(dimension_semantics):
    kwargs = dict(dimension_semantics=tuple(dimension_semantics))
    limit = _vmem_limit_bytes()
    if limit is not None:
        kwargs["vmem_limit_bytes"] = int(limit)
    return pltpu.CompilerParams(**kwargs)


def _pick_m_tile(M, K, N, budget_bytes=8 << 20, max_tm=1024):
    """Largest row tile (multiple of 16) whose double-buffered blocks fit budget."""
    kp, np_ = _round_up(K, 128), _round_up(N, 128)   # account for lane padding
    m16 = _round_up(M, 16)
    for tm in (1024, 512, 256, 128, 64, 32, 16):
        if tm > max_tm or tm > m16:
            continue
        step_bytes = 2 * tm * kp * 2 + 2 * tm * np_ * 4   # 2x bf16 in + 2x (<=f32) out
        if step_bytes <= budget_bytes:
            return tm
    return 16


# ----------------------------------------------------------------------------
# Pallas kernel: out = maybe_relu( X @ W + bias )   (BN scale pre-folded into W)
# ----------------------------------------------------------------------------
def fused_matmul_kernel(x_ref, w_ref, b_ref, o_ref, *, relu):
    y = jnp.dot(x_ref[...], w_ref[...], preferred_element_type=jnp.float32)
    y = y + b_ref[...]                       # (1, N) broadcasts over (tm, N)
    if relu:
        y = jnp.maximum(y, 0.0)
    o_ref[...] = y.astype(o_ref.dtype)


def fused_matmul_bias(x, w, b, *, relu, out_dtype):
    """x: (M, K) bf16, w: (K, N) bf16, b: (1, N) f32 -> (M, N) out_dtype."""
    M, K = x.shape
    K2, N = w.shape
    assert K == K2 and b.shape == (1, N)

    tm = _pick_m_tile(M, K, N)
    Mp = _round_up(M, tm)
    if Mp != M:                               # remainder tile -> zero-pad rows
        x = jnp.pad(x, ((0, Mp - M), (0, 0)))

    out_bytes = jnp.dtype(out_dtype).itemsize
    cost = pl.CostEstimate(
        flops=int(2 * Mp * K * N),
        transcendentals=0,
        bytes_accessed=int(Mp * K * x.dtype.itemsize + K * N * w.dtype.itemsize
                           + N * 4 + Mp * N * out_bytes),
    )

    out = pl.pallas_call(
        partial(fused_matmul_kernel, relu=relu),
        out_shape=jax.ShapeDtypeStruct((Mp, N), out_dtype),
        grid=(Mp // tm,),
        in_specs=[
            pl.BlockSpec((tm, K), lambda i: (i, 0)),   # pipelined row tile of X
            pl.BlockSpec((K, N), lambda i: (0, 0)),    # resident weight
            pl.BlockSpec((1, N), lambda i: (0, 0)),    # resident bias
        ],
        out_specs=pl.BlockSpec((tm, N), lambda i: (i, 0)),
        compiler_params=_compiler_params(("parallel",)),
        cost_estimate=cost,
    )(x, w, b)
    return out[:M] if Mp != M else out


# ----------------------------------------------------------------------------
# Glue: im2col for a 3x3 / stride-2 / pad-1 conv, NHWC, channel-minor features.
# Feature ordering is (kh, kw, C_in) = tap-major, matching the weight prep in
# init_params (w.transpose(2, 3, 1, 0).reshape(9*C_in, C_out)).
# ----------------------------------------------------------------------------
def _im2col_3x3_s2_nhwc(x):
    B, H, W, C = x.shape
    Ho, Wo = H // 2, W // 2
    xp = jnp.pad(x, ((0, 0), (1, 1), (1, 1), (0, 0)))
    taps = []
    for i in range(3):
        for j in range(3):
            taps.append(xp[:, i:i + 2 * Ho - 1:2, j:j + 2 * Wo - 1:2, :])
    rows = jnp.concatenate(taps, axis=-1)               # (B, Ho, Wo, 9*C)
    return rows.reshape(B * Ho * Wo, 9 * C), Ho, Wo


def conv3x3_s2_bn_relu(h, w_flat, bias):
    """h: (B, H, W, C) bf16 NHWC; w_flat: (9*C, Cout) bf16 (BN folded); bias: (1, Cout) f32."""
    B = h.shape[0]
    rows, Ho, Wo = _im2col_3x3_s2_nhwc(h)
    out = fused_matmul_bias(rows, w_flat, bias, relu=True, out_dtype=jnp.bfloat16)
    return out.reshape(B, Ho, Wo, -1)


# ----------------------------------------------------------------------------
# ConvStem forward
# ----------------------------------------------------------------------------
def conv_stem_forward(x_nchw, params):
    """x: (B, 3, H, W), H == W divisible by 16 -> (B, (H//16)*(W//16), embed_dim)."""
    h = jnp.transpose(x_nchw, (0, 2, 3, 1)).astype(jnp.bfloat16)   # NHWC, once

    # 4 x [conv3x3 s2 p1 (no bias) + BN (folded) + ReLU], each one fused kernel
    for (w_flat, bias) in params["stem"]:
        h = conv3x3_s2_bn_relu(h, w_flat, bias)

    # final 1x1 conv (with bias), no BN, no ReLU
    w_proj, b_proj = params["proj"]
    B, Hc, Wc, Cc = h.shape
    rows = h.reshape(B * Hc * Wc, Cc)
    out = fused_matmul_bias(rows, w_proj, b_proj, relu=False, out_dtype=jnp.float32)

    # PyTorch: x.flatten(2).transpose(1, 2) -> (B, num_patches, embed_dim),
    # patches row-major over (H, W).  norm = Identity.
    return out.reshape(B, Hc * Wc, -1)


# ----------------------------------------------------------------------------
# Deterministic parameter initialization (synthetic) + f32 copies for reference
# ----------------------------------------------------------------------------
def init_params(key, embed_dim=64, eps=1e-5):
    stem_kernel, stem_ref = [], []
    in_dim, out_dim = 3, embed_dim // 8
    for _ in range(4):
        key, kw, kg, kb, km, kv = jax.random.split(key, 6)
        w = 0.1 * jax.random.normal(kw, (out_dim, in_dim, 3, 3), jnp.float32)
        gamma = 1.0 + 0.1 * jax.random.normal(kg, (out_dim,), jnp.float32)
        beta = 0.1 * jax.random.normal(kb, (out_dim,), jnp.float32)
        mean = 0.1 * jax.random.normal(km, (out_dim,), jnp.float32)
        var = jax.random.uniform(kv, (out_dim,), jnp.float32, 0.5, 1.5)
        scale = gamma * jax.lax.rsqrt(var + eps)          # eval-mode BN fold
        bias = beta - mean * scale
        # (C_out, C_in, kh, kw) -> (kh*kw*C_in, C_out), BN scale folded into W.
        w_taps = jnp.transpose(w, (2, 3, 1, 0)).reshape(9 * in_dim, out_dim)
        w_flat = (w_taps * scale[None, :]).astype(jnp.bfloat16)
        stem_kernel.append((w_flat, bias.reshape(1, -1)))
        stem_ref.append((w, scale, bias))
        in_dim, out_dim = out_dim, out_dim * 2

    key, kw, kb = jax.random.split(key, 3)
    w_proj = 0.1 * jax.random.normal(kw, (embed_dim, in_dim, 1, 1), jnp.float32)
    b_proj = 0.1 * jax.random.normal(kb, (embed_dim,), jnp.float32)
    w_proj_flat = jnp.transpose(w_proj.reshape(embed_dim, in_dim)).astype(jnp.bfloat16)
    return {
        "stem": stem_kernel,
        "proj": (w_proj_flat, b_proj.reshape(1, -1)),
        "ref": {"stem": stem_ref, "proj": (w_proj, b_proj)},
    }


# ----------------------------------------------------------------------------
# Plain-JAX f32 reference (independent: lax.conv_general_dilated)
# ----------------------------------------------------------------------------
def conv_stem_reference(x_nchw, params):
    h = jnp.transpose(x_nchw, (0, 2, 3, 1)).astype(jnp.float32)
    for (w, scale, bias) in params["ref"]["stem"]:
        y = jax.lax.conv_general_dilated(
            h, w, window_strides=(2, 2), padding=((1, 1), (1, 1)),
            dimension_numbers=("NHWC", "OIHW", "NHWC"),
            precision=jax.lax.Precision.HIGHEST)
        h = jnp.maximum(y * scale + bias, 0.0)
    w_proj, b_proj = params["ref"]["proj"]
    B, Hc, Wc, Cc = h.shape
    embed_dim = w_proj.shape[0]
    out = h.reshape(B * Hc * Wc, Cc) @ w_proj.reshape(embed_dim, Cc).T + b_proj
    return out.reshape(B, Hc * Wc, embed_dim)


if __name__ == "__main__":
    key = jax.random.PRNGKey(0)
    key, kx = jax.random.split(key)

    # Small shapes consistent with the module: img_size divisible by
    # patch_size=16, in_chans=3, embed_dim divisible by 8.
    B, C, H, W = 2, 3, 32, 32
    embed_dim = 64
    x = jax.random.normal(kx, (B, C, H, W), jnp.float32)
    params = init_params(key, embed_dim=embed_dim)

    out = jax.block_until_ready(jax.jit(conv_stem_forward)(x, params))

    assert out.shape == (B, (H // 16) * (W // 16), embed_dim), out.shape
    assert bool(jnp.all(jnp.isfinite(out)))

    # Cross-check against an independent plain-JAX f32 reference.  The kernel
    # path uses bf16 activations/weights, so allow a small slack.
    ref = jax.jit(conv_stem_reference)(x, params)
    max_err = float(jnp.max(jnp.abs(out - ref)))
    ref_scale = float(jnp.max(jnp.abs(ref)))
    assert max_err <= 0.1 * ref_scale + 0.1, (max_err, ref_scale)

    print("KERNEL_OK")
</pallas_src>

<mosaic_0001>
module attributes {stable_mosaic.version = 11 : i64} {
  func.func @fused_matmul_kernel(%arg0: i32, %arg1: memref<512x27xbf16, #tpu.memory_space<vmem>>, %arg2: memref<27x8xbf16, #tpu.memory_space<vmem>>, %arg3: memref<1x8xf32, #tpu.memory_space<vmem>>, %arg4: memref<512x8xbf16, #tpu.memory_space<vmem>>) attributes {dimension_semantics = [#tpu.dimension_semantics<parallel>], iteration_bounds = array<i64: 1>, scalar_prefetch = 0 : i64, scratch_operands = 0 : i64, tpu.core_type = #tpu.core_type<tc>, window_params = [{transform_indices = @transform_0, window_bounds = array<i64: 512, 27>}, {pipeline_mode = #tpu.pipeline_mode<synchronous>, transform_indices = @transform_1, window_bounds = array<i64: 27, 8>}, {pipeline_mode = #tpu.pipeline_mode<synchronous>, transform_indices = @transform_2, window_bounds = array<i64: 1, 8>}, {transform_indices = @transform_3, window_bounds = array<i64: 512, 8>}]} {
    %c0 = arith.constant 0 : index
    %c0_0 = arith.constant 0 : index
    %0 = vector.load %arg1[%c0, %c0_0] : memref<512x27xbf16, #tpu.memory_space<vmem>>, vector<512x27xbf16>
    %c0_1 = arith.constant 0 : index
    %c0_2 = arith.constant 0 : index
    %1 = vector.load %arg2[%c0_1, %c0_2] : memref<27x8xbf16, #tpu.memory_space<vmem>>, vector<27x8xbf16>
    %cst = arith.constant dense<0.000000e+00> : vector<512x8xf32>
    %2 = tpu.matmul %0, %1, %cst {dimension_numbers = #tpu.dot_dimension_numbers<[1], [0], [0], [1], [0, 0, 1, 1], [], []>} : vector<512x27xbf16>, vector<27x8xbf16>, vector<512x8xf32> -> vector<512x8xf32>
    %c0_3 = arith.constant 0 : index
    %c0_4 = arith.constant 0 : index
    %3 = vector.load %arg3[%c0_3, %c0_4] : memref<1x8xf32, #tpu.memory_space<vmem>>, vector<1x8xf32>
    %4 = vector.broadcast %3 : vector<1x8xf32> to vector<512x8xf32>
    %5 = arith.addf %2, %4 : vector<512x8xf32>
    %cst_5 = arith.constant 0.000000e+00 : f32
    %6 = vector.broadcast %cst_5 : f32 to vector<512x8xf32>
    %7 = arith.maximumf %5, %6 : vector<512x8xf32>
    %8 = arith.truncf %7 : vector<512x8xf32> to vector<512x8xbf16>
    %c0_6 = arith.constant 0 : index
    %c0_7 = arith.constant 0 : index
    %9 = vector.load %arg4[%c0_6, %c0_7] : memref<512x8xbf16, #tpu.memory_space<vmem>>, vector<512x8xbf16>
    tpu.vector_store %arg4[%c0_6, %c0_7], %8 {strides = array<i32>} : memref<512x8xbf16, #tpu.memory_space<vmem>>, vector<512x8xbf16>,
    return
  }
  func.func @transform_0(%arg0: i32) -> (i32, i32) {
    %c0_i32 = arith.constant 0 : i32
    %c0_i32_0 = arith.constant 0 : i32
    return %arg0, %c0_i32 : i32, i32
  }
  func.func @transform_1(%arg0: i32) -> (i32, i32) {
    %c0_i32 = arith.constant 0 : i32
    %c0_i32_0 = arith.constant 0 : i32
    %c0_i32_1 = arith.constant 0 : i32
    return %c0_i32, %c0_i32_0 : i32, i32
  }
  func.func @transform_2(%arg0: i32) -> (i32, i32) {
    %c0_i32 = arith.constant 0 : i32
    %c0_i32_0 = arith.constant 0 : i32
    %c0_i32_1 = arith.constant 0 : i32
    return %c0_i32, %c0_i32_0 : i32, i32
  }
  func.func @transform_3(%arg0: i32) -> (i32, i32) {
    %c0_i32 = arith.constant 0 : i32
    %c0_i32_0 = arith.constant 0 : i32
    return %arg0, %c0_i32 : i32, i32
  }
}

module attributes {stable_mosaic.version = 11 : i64} {
  func.func @fused_matmul_kernel(%arg0: i32, %arg1: memref<128x72xbf16, #tpu.memory_space<vmem>>, %arg2: memref<72x16xbf16, #tpu.memory_space<vmem>>, %arg3: memref<1x16xf32, #tpu.memory_space<vmem>>, %arg4: memref<128x16xbf16, #tpu.memory_space<vmem>>) attributes {dimension_semantics = [#tpu.dimension_semantics<parallel>], iteration_bounds = array<i64: 1>, scalar_prefetch = 0 : i64, scratch_operands = 0 : i64, tpu.core_type = #tpu.core_type<tc>, window_params = [{transform_indices = @transform_0, window_bounds = array<i64: 128, 72>}, {pipeline_mode = #tpu.pipeline_mode<synchronous>, transform_indices = @transform_1, window_bounds = array<i64: 72, 16>}, {pipeline_mode = #tpu.pipeline_mode<synchronous>, transform_indices = @transform_2, window_bounds = array<i64: 1, 16>}, {transform_indices = @transform_3, window_bounds = array<i64: 128, 16>}]} {
    %c0 = arith.constant 0 : index
    %c0_0 = arith.constant 0 : index
    %0 = vector.load %arg1[%c0, %c0_0] : memref<128x72xbf16, #tpu.memory_space<vmem>>, vector<128x72xbf16>
    %c0_1 = arith.constant 0 : index
    %c0_2 = arith.constant 0 : index
    %1 = vector.load %arg2[%c0_1, %c0_2] : memref<72x16xbf16, #tpu.memory_space<vmem>>, vector<72x16xbf16>
    %cst = arith.constant dense<0.000000e+00> : vector<128x16xf32>
    %2 = tpu.matmul %0, %1, %cst {dimension_numbers = #tpu.dot_dimension_numbers<[1], [0], [0], [1], [0, 0, 1, 1], [], []>} : vector<128x72xbf16>, vector<72x16xbf16>, vector<128x16xf32> -> vector<128x16xf32>
    %c0_3 = arith.constant 0 : index
    %c0_4 = arith.constant 0 : index
    %3 = vector.load %arg3[%c0_3, %c0_4] : memref<1x16xf32, #tpu.memory_space<vmem>>, vector<1x16xf32>
    %4 = vector.broadcast %3 : vector<1x16xf32> to vector<128x16xf32>
    %5 = arith.addf %2, %4 : vector<128x16xf32>
    %cst_5 = arith.constant 0.000000e+00 : f32
    %6 = vector.broadcast %cst_5 : f32 to vector<128x16xf32>
    %7 = arith.maximumf %5, %6 : vector<128x16xf32>
    %8 = arith.truncf %7 : vector<128x16xf32> to vector<128x16xbf16>
    %c0_6 = arith.constant 0 : index
    %c0_7 = arith.constant 0 : index
    %9 = vector.load %arg4[%c0_6, %c0_7] : memref<128x16xbf16, #tpu.memory_space<vmem>>, vector<128x16xbf16>
    tpu.vector_store %arg4[%c0_6, %c0_7], %8 {strides = array<i32>} : memref<128x16xbf16, #tpu.memory_space<vmem>>, vector<128x16xbf16>,
    return
  }
  func.func @transform_0(%arg0: i32) -> (i32, i32) {
    %c0_i32 = arith.constant 0 : i32
    %c0_i32_0 = arith.constant 0 : i32
    return %arg0, %c0_i32 : i32, i32
  }
  func.func @transform_1(%arg0: i32) -> (i32, i32) {
    %c0_i32 = arith.constant 0 : i32
    %c0_i32_0 = arith.constant 0 : i32
    %c0_i32_1 = arith.constant 0 : i32
    return %c0_i32, %c0_i32_0 : i32, i32
  }
  func.func @transform_2(%arg0: i32) -> (i32, i32) {
    %c0_i32 = arith.constant 0 : i32
    %c0_i32_0 = arith.constant 0 : i32
    %c0_i32_1 = arith.constant 0 : i32
    return %c0_i32, %c0_i32_0 : i32, i32
  }
  func.func @transform_3(%arg0: i32) -> (i32, i32) {
    %c0_i32 = arith.constant 0 : i32
    %c0_i32_0 = arith.constant 0 : i32
    return %arg0, %c0_i32 : i32, i32
  }
}

module attributes {stable_mosaic.version = 11 : i64} {
  func.func @fused_matmul_kernel(%arg0: i32, %arg1: memref<32x144xbf16, #tpu.memory_space<vmem>>, %arg2: memref<144x32xbf16, #tpu.memory_space<vmem>>, %arg3: memref<1x32xf32, #tpu.memory_space<vmem>>, %arg4: memref<32x32xbf16, #tpu.memory_space<vmem>>) attributes {dimension_semantics = [#tpu.dimension_semantics<parallel>], iteration_bounds = array<i64: 1>, scalar_prefetch = 0 : i64, scratch_operands = 0 : i64, tpu.core_type = #tpu.core_type<tc>, window_params = [{transform_indices = @transform_0, window_bounds = array<i64: 32, 144>}, {pipeline_mode = #tpu.pipeline_mode<synchronous>, transform_indices = @transform_1, window_bounds = array<i64: 144, 32>}, {pipeline_mode = #tpu.pipeline_mode<synchronous>, transform_indices = @transform_2, window_bounds = array<i64: 1, 32>}, {transform_indices = @transform_3, window_bounds = array<i64: 32, 32>}]} {
    %c0 = arith.constant 0 : index
    %c0_0 = arith.constant 0 : index
    %0 = vector.load %arg1[%c0, %c0_0] : memref<32x144xbf16, #tpu.memory_space<vmem>>, vector<32x144xbf16>
    %c0_1 = arith.constant 0 : index
    %c0_2 = arith.constant 0 : index
    %1 = vector.load %arg2[%c0_1, %c0_2] : memref<144x32xbf16, #tpu.memory_space<vmem>>, vector<144x32xbf16>
    %cst = arith.constant dense<0.000000e+00> : vector<32x32xf32>
    %2 = tpu.matmul %0, %1, %cst {dimension_numbers = #tpu.dot_dimension_numbers<[1], [0], [0], [1], [0, 0, 1, 1], [], []>} : vector<32x144xbf16>, vector<144x32xbf16>, vector<32x32xf32> -> vector<32x32xf32>
    %c0_3 = arith.constant 0 : index
    %c0_4 = arith.constant 0 : index
    %3 = vector.load %arg3[%c0_3, %c0_4] : memref<1x32xf32, #tpu.memory_space<vmem>>, vector<1x32xf32>
    %4 = vector.broadcast %3 : vector<1x32xf32> to vector<32x32xf32>
    %5 = arith.addf %2, %4 : vector<32x32xf32>
    %cst_5 = arith.constant 0.000000e+00 : f32
    %6 = vector.broadcast %cst_5 : f32 to vector<32x32xf32>
    %7 = arith.maximumf %5, %6 : vector<32x32xf32>
    %8 = arith.truncf %7 : vector<32x32xf32> to vector<32x32xbf16>
    %c0_6 = arith.constant 0 : index
    %c0_7 = arith.constant 0 : index
    %9 = vector.load %arg4[%c0_6, %c0_7] : memref<32x32xbf16, #tpu.memory_space<vmem>>, vector<32x32xbf16>
    tpu.vector_store %arg4[%c0_6, %c0_7], %8 {strides = array<i32>} : memref<32x32xbf16, #tpu.memory_space<vmem>>, vector<32x32xbf16>,
    return
  }
  func.func @transform_0(%arg0: i32) -> (i32, i32) {
    %c0_i32 = arith.constant 0 : i32
    %c0_i32_0 = arith.constant 0 : i32
    return %arg0, %c0_i32 : i32, i32
  }
  func.func @transform_1(%arg0: i32) -> (i32, i32) {
    %c0_i32 = arith.constant 0 : i32
    %c0_i32_0 = arith.constant 0 : i32
    %c0_i32_1 = arith.constant 0 : i32
    return %c0_i32, %c0_i32_0 : i32, i32
  }
  func.func @transform_2(%arg0: i32) -> (i32, i32) {
    %c0_i32 = arith.constant 0 : i32
    %c0_i32_0 = arith.constant 0 : i32
    %c0_i32_1 = arith.constant 0 : i32
    return %c0_i32, %c0_i32_0 : i32, i32
  }
  func.func @transform_3(%arg0: i32) -> (i32, i32) {
    %c0_i32 = arith.constant 0 : i32
    %c0_i32_0 = arith.constant 0 : i32
    return %arg0, %c0_i32 : i32, i32
  }
}

module attributes {stable_mosaic.version = 11 : i64} {
  func.func @fused_matmul_kernel(%arg0: i32, %arg1: memref<16x288xbf16, #tpu.memory_space<vmem>>, %arg2: memref<288x64xbf16, #tpu.memory_space<vmem>>, %arg3: memref<1x64xf32, #tpu.memory_space<vmem>>, %arg4: memref<16x64xbf16, #tpu.memory_space<vmem>>) attributes {dimension_semantics = [#tpu.dimension_semantics<parallel>], iteration_bounds = array<i64: 1>, scalar_prefetch = 0 : i64, scratch_operands = 0 : i64, tpu.core_type = #tpu.core_type<tc>, window_params = [{transform_indices = @transform_0, window_bounds = array<i64: 16, 288>}, {pipeline_mode = #tpu.pipeline_mode<synchronous>, transform_indices = @transform_1, window_bounds = array<i64: 288, 64>}, {pipeline_mode = #tpu.pipeline_mode<synchronous>, transform_indices = @transform_2, window_bounds = array<i64: 1, 64>}, {transform_indices = @transform_3, window_bounds = array<i64: 16, 64>}]} {
    %c0 = arith.constant 0 : index
    %c0_0 = arith.constant 0 : index
    %0 = vector.load %arg1[%c0, %c0_0] : memref<16x288xbf16, #tpu.memory_space<vmem>>, vector<16x288xbf16>
    %c0_1 = arith.constant 0 : index
    %c0_2 = arith.constant 0 : index
    %1 = vector.load %arg2[%c0_1, %c0_2] : memref<288x64xbf16, #tpu.memory_space<vmem>>, vector<288x64xbf16>
    %cst = arith.constant dense<0.000000e+00> : vector<16x64xf32>
    %2 = tpu.matmul %0, %1, %cst {dimension_numbers = #tpu.dot_dimension_numbers<[1], [0], [0], [1], [0, 0, 1, 1], [], []>} : vector<16x288xbf16>, vector<288x64xbf16>, vector<16x64xf32> -> vector<16x64xf32>
    %c0_3 = arith.constant 0 : index
    %c0_4 = arith.constant 0 : index
    %3 = vector.load %arg3[%c0_3, %c0_4] : memref<1x64xf32, #tpu.memory_space<vmem>>, vector<1x64xf32>
    %4 = vector.broadcast %3 : vector<1x64xf32> to vector<16x64xf32>
    %5 = arith.addf %2, %4 : vector<16x64xf32>
    %cst_5 = arith.constant 0.000000e+00 : f32
    %6 = vector.broadcast %cst_5 : f32 to vector<16x64xf32>
    %7 = arith.maximumf %5, %6 : vector<16x64xf32>
    %8 = arith.truncf %7 : vector<16x64xf32> to vector<16x64xbf16>
    %c0_6 = arith.constant 0 : index
    %c0_7 = arith.constant 0 : index
    %9 = vector.load %arg4[%c0_6, %c0_7] : memref<16x64xbf16, #tpu.memory_space<vmem>>, vector<16x64xbf16>
    tpu.vector_store %arg4[%c0_6, %c0_7], %8 {strides = array<i32>} : memref<16x64xbf16, #tpu.memory_space<vmem>>, vector<16x64xbf16>,
    return
  }
  func.func @transform_0(%arg0: i32) -> (i32, i32) {
    %c0_i32 = arith.constant 0 : i32
    %c0_i32_0 = arith.constant 0 : i32
    return %arg0, %c0_i32 : i32, i32
  }
  func.func @transform_1(%arg0: i32) -> (i32, i32) {
    %c0_i32 = arith.constant 0 : i32
    %c0_i32_0 = arith.constant 0 : i32
    %c0_i32_1 = arith.constant 0 : i32
    return %c0_i32, %c0_i32_0 : i32, i32
  }
  func.func @transform_2(%arg0: i32) -> (i32, i32) {
    %c0_i32 = arith.constant 0 : i32
    %c0_i32_0 = arith.constant 0 : i32
    %c0_i32_1 = arith.constant 0 : i32
    return %c0_i32, %c0_i32_0 : i32, i32
  }
  func.func @transform_3(%arg0: i32) -> (i32, i32) {
    %c0_i32 = arith.constant 0 : i32
    %c0_i32_0 = arith.constant 0 : i32
    return %arg0, %c0_i32 : i32, i32
  }
}

module attributes {stable_mosaic.version = 11 : i64} {
  func.func @fused_matmul_kernel(%arg0: i32, %arg1: memref<16x64xbf16, #tpu.memory_space<vmem>>, %arg2: memref<64x64xbf16, #tpu.memory_space<vmem>>, %arg3: memref<1x64xf32, #tpu.memory_space<vmem>>, %arg4: memref<16x64xf32, #tpu.memory_space<vmem>>) attributes {dimension_semantics = [#tpu.dimension_semantics<parallel>], iteration_bounds = array<i64: 1>, scalar_prefetch = 0 : i64, scratch_operands = 0 : i64, tpu.core_type = #tpu.core_type<tc>, window_params = [{transform_indices = @transform_0, window_bounds = array<i64: 16, 64>}, {pipeline_mode = #tpu.pipeline_mode<synchronous>, transform_indices = @transform_1, window_bounds = array<i64: 64, 64>}, {pipeline_mode = #tpu.pipeline_mode<synchronous>, transform_indices = @transform_2, window_bounds = array<i64: 1, 64>}, {transform_indices = @transform_3, window_bounds = array<i64: 16, 64>}]} {
    %c0 = arith.constant 0 : index
    %c0_0 = arith.constant 0 : index
    %0 = vector.load %arg1[%c0, %c0_0] : memref<16x64xbf16, #tpu.memory_space<vmem>>, vector<16x64xbf16>
    %c0_1 = arith.constant 0 : index
    %c0_2 = arith.constant 0 : index
    %1 = vector.load %arg2[%c0_1, %c0_2] : memref<64x64xbf16, #tpu.memory_space<vmem>>, vector<64x64xbf16>
    %cst = arith.constant dense<0.000000e+00> : vector<16x64xf32>
    %2 = tpu.matmul %0, %1, %cst {dimension_numbers = #tpu.dot_dimension_numbers<[1], [0], [0], [1], [0, 0, 1, 1], [], []>} : vector<16x64xbf16>, vector<64x64xbf16>, vector<16x64xf32> -> vector<16x64xf32>
    %c0_3 = arith.constant 0 : index
    %c0_4 = arith.constant 0 : index
    %3 = vector.load %arg3[%c0_3, %c0_4] : memref<1x64xf32, #tpu.memory_space<vmem>>, vector<1x64xf32>
    %4 = vector.broadcast %3 : vector<1x64xf32> to vector<16x64xf32>
    %5 = arith.addf %2, %4 : vector<16x64xf32>
    %c0_5 = arith.constant 0 : index
    %c0_6 = arith.constant 0 : index
    %6 = vector.load %arg4[%c0_5, %c0_6] : memref<16x64xf32, #tpu.memory_space<vmem>>, vector<16x64xf32>
    tpu.vector_store %arg4[%c0_5, %c0_6], %5 {strides = array<i32>} : memref<16x64xf32, #tpu.memory_space<vmem>>, vector<16x64xf32>,
    return
  }
  func.func @transform_0(%arg0: i32) -> (i32, i32) {
    %c0_i32 = arith.constant 0 : i32
    %c0_i32_0 = arith.constant 0 : i32
    return %arg0, %c0_i32 : i32, i32
  }
  func.func @transform_1(%arg0: i32) -> (i32, i32) {
    %c0_i32 = arith.constant 0 : i32
    %c0_i32_0 = arith.constant 0 : i32
    %c0_i32_1 = arith.constant 0 : i32
    return %c0_i32, %c0_i32_0 : i32, i32
  }
  func.func @transform_2(%arg0: i32) -> (i32, i32) {
    %c0_i32 = arith.constant 0 : i32
    %c0_i32_0 = arith.constant 0 : i32
    %c0_i32_1 = arith.constant 0 : i32
    return %c0_i32, %c0_i32_0 : i32, i32
  }
  func.func @transform_3(%arg0: i32) -> (i32, i32) {
    %c0_i32 = arith.constant 0 : i32
    %c0_i32_0 = arith.constant 0 : i32
    return %arg0, %c0_i32 : i32, i32
  }
}

</mosaic_0001>

<llo_original>
// kernel: conv_stem_forward.5
$region0: #{conv_stem_forward.5}
  #allocation0 [shape = 'u32[]', space=smem, size = 0x4, offset = 0x4, fixed_abs, tag = 'smem constant byte address 0x4 - core index']
  #allocation1 [shape = 'u32[144,128]{1,0:T(1,128)}', space=vmem, size = 0x12000, scoped, tag = 'internal scratch']
  %s0 = inlined_call_operand.vmem [shape: bf16[512,27], index: 0, kind: input, shape index: {}]
  %s1 = inlined_call_operand.vmem [shape: bf16[27,8], index: 1, kind: input, shape index: {}]
  %s2 = inlined_call_operand.vmem [shape: f32[1,8], index: 2, kind: input, shape index: {}]
  %s3 = inlined_call_operand.vmem [shape: bf16[512,8], index: 3, kind: output, shape index: {}]
  %s4 = sld [smem:[#allocation0]]
  $region22: #{conv_stem_forward.5} parent=0
    _
  %s6 = ssub.s32 1, %s4
  %s7 = scalar_select 0, %s6, %s4
  // Predicated region
  $region2: #{conv_stem_forward.5} parent=0 // pred_check
    _
  $region3: #{conv_stem_forward.5} parent=0 // pred_check_branch
    %9 = sbr.rel (0) target = $region5
  $region4: #{conv_stem_forward.5} parent=0 // pred_region
    _
  $region5: #{conv_stem_forward.5} parent=0 // pred_fallthru
    _
  // Predicated region
  $region6: #{conv_stem_forward.5} parent=0 // pred_check
    _
  $region7: #{conv_stem_forward.5} parent=0 // pred_check_branch
    %11 = sbr.rel (0) target = $region9
  $region8: #{conv_stem_forward.5} parent=0 // pred_region
    _
  $region9: #{conv_stem_forward.5} parent=0 // pred_fallthru
    _
  // Predicated region
  $region10: #{conv_stem_forward.5} parent=0 // pred_check
    _
  $region11: #{conv_stem_forward.5} parent=0 // pred_check_branch
    %13 = sbr.rel (0) target = $region13
  $region12: #{conv_stem_forward.5} parent=0 // pred_region
    _
  $region13: #{conv_stem_forward.5} parent=0 // pred_fallthru
    _
  %v15 = vld [vmem:[%s0] sm:$0xf]
  %v16 = vld [vmem:[%s0 + $0x4] sm:$0xf]
  %v17 = vld [vmem:[%s0 + $0x8] sm:$0xf]
  %v18 = vld [vmem:[%s0 + $0xc] sm:$0xf]
  %v19 = vld [vmem:[%s0 + $0x10] sm:$0xf]
  %v20 = vld [vmem:[%s0 + $0x14] sm:$0xf]
  %v21 = vld [vmem:[%s0 + $0x18] sm:$0xf]
  %v22 = vld [vmem:[%s0 + $0x1c] sm:$0xf]
  %v23 = vld [vmem:[%s0 + $0x20] sm:$0xf]
  %v24 = vld [vmem:[%s0 + $0x24] sm:$0xf]
  %v25 = vld [vmem:[%s0 + $0x28] sm:$0xf]
  %v26 = vld [vmem:[%s0 + $0x2c] sm:$0xf]
  %v27 = vld [vmem:[%s0 + $0x30] sm:$0xf]
  %v28 = vld [vmem:[%s0 + $0x34] sm:$0xf]
  %v29 = vld [vmem:[%s0 + $0x38] sm:$0xf]
  %v30 = vld [vmem:[%s0 + $0x3c] sm:$0xf]
  %v31 = vld [vmem:[%s0 + $0x40] sm:$0xf]
  %v32 = vld [vmem:[%s0 + $0x44] sm:$0xf]
  %v33 = vld [vmem:[%s0 + $0x48] sm:$0xf]
  %v34 = vld [vmem:[%s0 + $0x4c] sm:$0xf]
  %v35 = vld [vmem:[%s0 + $0x50] sm:$0xf]
  %v36 = vld [vmem:[%s0 + $0x54] sm:$0xf]
  %v37 = vld [vmem:[%s0 + $0x58] sm:$0xf]
  %v38 = vld [vmem:[%s0 + $0x5c] sm:$0xf]
  %v39 = vld [vmem:[%s0 + $0x60] sm:$0xf]
  %v40 = vld [vmem:[%s0 + $0x64] sm:$0xf]
  %v41 = vld [vmem:[%s0 + $0x68] sm:$0xf]
  %v42 = vld [vmem:[%s0 + $0x6c] sm:$0xf]
  %v43 = vld [vmem:[%s0 + $0x70] sm:$0xf]
  %v44 = vld [vmem:[%s0 + $0x74] sm:$0xf]
  %v45 = vld [vmem:[%s0 + $0x78] sm:$0xf]
  %v46 = vld [vmem:[%s0 + $0x7c] sm:$0xf]
  %v47 = vld [vmem:[%s0 + $0x80] sm:$0xf]
  %v48 = vld [vmem:[%s0 + $0x84] sm:$0xf]
  %v49 = vld [vmem:[%s0 + $0x88] sm:$0xf]
  %v50 = vld [vmem:[%s0 + $0x8c] sm:$0xf]
  %v51 = vld [vmem:[%s0 + $0x90] sm:$0xf]
  %v52 = vld [vmem:[%s0 + $0x94] sm:$0xf]
  %v53 = vld [vmem:[%s0 + $0x98] sm:$0xf]
  %v54 = vld [vmem:[%s0 + $0x9c] sm:$0xf]
  %v55 = vld [vmem:[%s0 + $0xa0] sm:$0xf]
  %v56 = vld [vmem:[%s0 + $0xa4] sm:$0xf]
  %v57 = vld [vmem:[%s0 + $0xa8] sm:$0xf]
  %v58 = vld [vmem:[%s0 + $0xac] sm:$0xf]
  %v59 = vld [vmem:[%s0 + $0xb0] sm:$0xf]
  %v60 = vld [vmem:[%s0 + $0xb4] sm:$0xf]
  %v61 = vld [vmem:[%s0 + $0xb8] sm:$0xf]
  %v62 = vld [vmem:[%s0 + $0xbc] sm:$0xf]
  %v63 = vld [vmem:[%s0 + $0xc0] sm:$0xf]
  %v64 = vld [vmem:[%s0 + $0xc4] sm:$0xf]
  %v65 = vld [vmem:[%s0 + $0xc8] sm:$0xf]
  %v66 = vld [vmem:[%s0 + $0xcc] sm:$0xf]
  %v67 = vld [vmem:[%s0 + $0xd0] sm:$0xf]
  %v68 = vld [vmem:[%s0 + $0xd4] sm:$0xf]
  %v69 = vld [vmem:[%s0 + $0xd8] sm:$0xf]
  %v70 = vld [vmem:[%s0 + $0xdc] sm:$0xf]
  %v71 = vld [vmem:[%s0 + $0xe0] sm:$0xf]
  %v72 = vld [vmem:[%s0 + $0xe4] sm:$0xf]
  %v73 = vld [vmem:[%s0 + $0xe8] sm:$0xf]
  %v74 = vld [vmem:[%s0 + $0xec] sm:$0xf]
  %v75 = vld [vmem:[%s0 + $0xf0] sm:$0xf]
  %v76 = vld [vmem:[%s0 + $0xf4] sm:$0xf]
  %v77 = vld [vmem:[%s0 + $0xf8] sm:$0xf]
  %v78 = vld [vmem:[%s0 + $0xfc] sm:$0xf]
  %v79 = vld [vmem:[%s1] sm:$0xf]
  %v80 = vld [vmem:[%s1 + $0x4] sm:$0xf]
  %v81 = vld [vmem:[%s1 + $0x8] sm:$0xf]
  %v82 = vld [vmem:[%s1 + $0xc] sm:$0x3]
  %v83 = vld [vmem:[%s2] sm:$0x1]
  %v85 = vlaneseq
  %v86 = vshrl.u32 %v85, 7
  %v87 = vsub.s32 0, %v86
  %v88 = vrot.slane %v83, %v87
  %v154 = vunpack.c.l.b16 %v15
  %v155 = vunpack.c.l.b16 %v16
  %v156 = vunpack.c.l.b16 %v17
  %v157 = vunpack.c.l.b16 %v18
  %v158 = vunpack.c.l.b16 %v19
  %v159 = vunpack.c.l.b16 %v20
  %v160 = vunpack.c.l.b16 %v21
  %v161 = vunpack.c.l.b16 %v22
  %v162 = vunpack.c.l.b16 %v23
  %v163 = vunpack.c.l.b16 %v24
  %v164 = vunpack.c.l.b16 %v25
  %v165 = vunpack.c.l.b16 %v26
  %v166 = vunpack.c.l.b16 %v27
  %v167 = vunpack.c.l.b16 %v28
  %v168 = vunpack.c.l.b16 %v29
  %v169 = vunpack.c.l.b16 %v30
  %v170 = vunpack.c.l.b16 %v31
  %v171 = vunpack.c.l.b16 %v32
  %v172 = vunpack.c.l.b16 %v33
  %v173 = vunpack.c.l.b16 %v34
  %v174 = vunpack.c.l.b16 %v35
  %v175 = vunpack.c.l.b16 %v36
  %v176 = vunpack.c.l.b16 %v37
  %v177 = vunpack.c.l.b16 %v38
  %v178 = vunpack.c.l.b16 %v39
  %v179 = vunpack.c.l.b16 %v40
  %v180 = vunpack.c.l.b16 %v41
  %v181 = vunpack.c.l.b16 %v42
  %v182 = vunpack.c.l.b16 %v43
  %v183 = vunpack.c.l.b16 %v44
  %v184 = vunpack.c.l.b16 %v45
  %v185 = vunpack.c.l.b16 %v46
  %v186 = vunpack.c.l.b16 %v47
  %v187 = vunpack.c.l.b16 %v48
  %v188 = vunpack.c.l.b16 %v49
  %v189 = vunpack.c.l.b16 %v50
  %v190 = vunpack.c.l.b16 %v51
  %v191 = vunpack.c.l.b16 %v52
  %v192 = vunpack.c.l.b16 %v53
  %v193 = vunpack.c.l.b16 %v54
  %v194 = vunpack.c.l.b16 %v55
  %v195 = vunpack.c.l.b16 %v56
  %v196 = vunpack.c.l.b16 %v57
  %v197 = vunpack.c.l.b16 %v58
  %v198 = vunpack.c.l.b16 %v59
  %v199 = vunpack.c.l.b16 %v60
  %v200 = vunpack.c.l.b16 %v61
  %v201 = vunpack.c.l.b16 %v62
  %v202 = vunpack.c.l.b16 %v63
  %v203 = vunpack.c.l.b16 %v64
  %v204 = vunpack.c.l.b16 %v65
  %v205 = vunpack.c.l.b16 %v66
  %v206 = vunpack.c.l.b16 %v67
  %v207 = vunpack.c.l.b16 %v68
  %v208 = vunpack.c.l.b16 %v69
  %v209 = vunpack.c.l.b16 %v70
  %v210 = vunpack.c.l.b16 %v71
  %v211 = vunpack.c.l.b16 %v72
  %v212 = vunpack.c.l.b16 %v73
  %v213 = vunpack.c.l.b16 %v74
  %v214 = vunpack.c.l.b16 %v75
  %v215 = vunpack.c.l.b16 %v76
  %v216 = vunpack.c.l.b16 %v77
  %v217 = vunpack.c.l.b16 %v78
  %v218 = vpack.c.b16 %v155, %v154
  %v219 = vpack.c.b16 %v157, %v156
  %v220 = vpack.c.b16 %v159, %v158
  %v221 = vpack.c.b16 %v161, %v160
  %v222 = vpack.c.b16 %v163, %v162
  %v223 = vpack.c.b16 %v165, %v164
  %v224 = vpack.c.b16 %v167, %v166
  %v225 = vpack.c.b16 %v169, %v168
  %v226 = vpack.c.b16 %v171, %v170
  %v227 = vpack.c.b16 %v173, %v172
  %v228 = vpack.c.b16 %v175, %v174
  %v229 = vpack.c.b16 %v177, %v176
  %v230 = vpack.c.b16 %v179, %v178
  %v231 = vpack.c.b16 %v181, %v180
  %v232 = vpack.c.b16 %v183, %v182
  %v233 = vpack.c.b16 %v185, %v184
  %v234 = vpack.c.b16 %v187, %v186
  %v235 = vpack.c.b16 %v189, %v188
  %v236 = vpack.c.b16 %v191, %v190
  %v237 = vpack.c.b16 %v193, %v192
  %v238 = vpack.c.b16 %v195, %v194
  %v239 = vpack.c.b16 %v197, %v196
  %v240 = vpack.c.b16 %v199, %v198
  %v241 = vpack.c.b16 %v201, %v200
  %v242 = vpack.c.b16 %v203, %v202
  %v243 = vpack.c.b16 %v205, %v204
  %v244 = vpack.c.b16 %v207, %v206
  %v245 = vpack.c.b16 %v209, %v208
  %v246 = vpack.c.b16 %v211, %v210
  %v247 = vpack.c.b16 %v213, %v212
  %v248 = vpack.c.b16 %v215, %v214
  %v249 = vpack.c.b16 %v217, %v216
  %v254 = vunpack.c.l.b16 %v79
  %v255 = vunpack.c.l.b16 %v80
  %v256 = vunpack.c.l.b16 %v81
  %v257 = vunpack.c.l.b16 %v82
  %v258 = vpack.c.b16 %v255, %v254
  %v259 = vpack.c.b16 %v257, %v256
  %vm261 = vcmask 220160
  %v263 = vsel %vm261, %v218, 0
  %v266 = vsel %vm261, %v219, 0
  %v269 = vsel %vm261, %v220, 0
  %v272 = vsel %vm261, %v221, 0
  %v275 = vsel %vm261, %v222, 0
  %v278 = vsel %vm261, %v223, 0
  %v281 = vsel %vm261, %v224, 0
  %v284 = vsel %vm261, %v225, 0
  %v287 = vsel %vm261, %v226, 0
  %v290 = vsel %vm261, %v227, 0
  %v293 = vsel %vm261, %v228, 0
  %v296 = vsel %vm261, %v229, 0
  %v299 = vsel %vm261, %v230, 0
  %v302 = vsel %vm261, %v231, 0
  %v305 = vsel %vm261, %v232, 0
  %v308 = vsel %vm261, %v233, 0
  %v311 = vsel %vm261, %v234, 0
  %v314 = vsel %vm261, %v235, 0
  %v317 = vsel %vm261, %v236, 0
  %v320 = vsel %vm261, %v237, 0
  %v323 = vsel %vm261, %v238, 0
  %v326 = vsel %vm261, %v239, 0
  %v329 = vsel %vm261, %v240, 0
  %v332 = vsel %vm261, %v241, 0
  %v335 = vsel %vm261, %v242, 0
  %v338 = vsel %vm261, %v243, 0
  %v341 = vsel %vm261, %v244, 0
  %v344 = vsel %vm261, %v245, 0
  %v347 = vsel %vm261, %v246, 0
  %v350 = vsel %vm261, %v247, 0
  %v353 = vsel %vm261, %v248, 0
  %v356 = vsel %vm261, %v249, 0
  %vm358 = vcmask 1044480
  %vm359 = vcmask 1045504
  %v360 = vsel %vm358, 4294967295, 65535
  %v361 = vsel %vm359, %v360, 0
  %v363 = vand.u32 %v259, %v361
  %365 = vmatprep.subr.bf16.mxu0 0
  %366 = vmatpush1.bf16.msra.mxu0 %v258
  %367 = vmatprep.subr.bf16.mxu0 0
  %368 = vmatpush1.bf16.msra.mxu0 %v363
  %369 = vmatprep.subr.bf16.mxu0 0
  %370 = vmatpush1.bf16.msra.mxu0 0
  %371 = vmatprep.subr.bf16.mxu0 0
  %372 = vmatpush1.bf16.msra.mxu0 0
  %373 = vmatprep.subr.bf16.mxu0 0
  %374 = vmatpush1.bf16.msra.mxu0 0
  %375 = vmatprep.subr.bf16.mxu0 0
  %376 = vmatpush1.bf16.msra.mxu0 0
  %377 = vmatprep.subr.bf16.mxu0 0
  %378 = vmatpush1.bf16.msra.mxu0 0
  %379 = vmatprep.subr.bf16.mxu0 0
  %380 = vmatpush1.bf16.msra.mxu0 0
  %381 = vmatprep.subr.bf16.mxu0 0
  %382 = vmatpush1.bf16.msra.mxu0 0
  %383 = vmatprep.subr.bf16.mxu0 0
  %384 = vmatpush1.bf16.msra.mxu0 0
  %385 = vmatprep.subr.bf16.mxu0 0
  %386 = vmatpush1.bf16.msra.mxu0 0
  %387 = vmatprep.subr.bf16.mxu0 0
  %388 = vmatpush1.bf16.msra.mxu0 0
  %389 = vmatprep.subr.bf16.mxu0 0
  %390 = vmatpush1.bf16.msra.mxu0 0
  %391 = vmatprep.subr.bf16.mxu0 0
  %392 = vmatpush1.bf16.msra.mxu0 0
  %393 = vmatprep.subr.bf16.mxu0 0
  %394 = vmatpush1.bf16.msra.mxu0 0
  %395 = vmatprep.subr.bf16.mxu0 0
  %396 = vmatpush1.bf16.msra.mxu0 0
  %397 = vmatprep.mubr.bf16.mxu0 0
  %398 = vmatmul.mubr.bf16.gmra.mrb[0].mxu0 %v263
  %v399 = vpop.f32.mrb[0].mxu0
  %v400 = vadd.f32 %v88, %v399
  %v401 = vpop.f32.mrb[0].mxu0
  %v402 = vpop.f32.mrb[0].mxu0
  %v403 = vadd.f32 %v88, %v402
  %v404 = vpop.f32.mrb[0].mxu0
  %405 = vmatprep.mubr.bf16.mxu0 0
  %406 = vmatmul.mubr.bf16.gmra.mrb[0].mxu0 %v266
  %v407 = vpop.f32.mrb[0].mxu0
  %v408 = vadd.f32 %v88, %v407
  %v409 = vpop.f32.mrb[0].mxu0
  %v410 = vpop.f32.mrb[0].mxu0
  %v411 = vadd.f32 %v88, %v410
  %v412 = vpop.f32.mrb[0].mxu0
  %413 = vmatprep.mubr.bf16.mxu0 0
  %414 = vmatmul.mubr.bf16.gmra.mrb[0].mxu0 %v269
  %v415 = vpop.f32.mrb[0].mxu0
  %v416 = vadd.f32 %v88, %v415
  %v417 = vpop.f32.mrb[0].mxu0
  %v418 = vpop.f32.mrb[0].mxu0
  %v419 = vadd.f32 %v88, %v418
  %v420 = vpop.f32.mrb[0].mxu0
  %421 = vmatprep.mubr.bf16.mxu0 0
  %422 = vmatmul.mubr.bf16.gmra.mrb[0].mxu0 %v272
  %v423 = vpop.f32.mrb[0].mxu0
  %v424 = vadd.f32 %v88, %v423
  %v425 = vpop.f32.mrb[0].mxu0
  %v426 = vpop.f32.mrb[0].mxu0
  %v427 = vadd.f32 %v88, %v426
  %v428 = vpop.f32.mrb[0].mxu0
  %429 = vmatprep.mubr.bf16.mxu0 0
  %430 = vmatmul.mubr.bf16.gmra.mrb[0].mxu0 %v275
  %v431 = vpop.f32.mrb[0].mxu0
  %v432 = vadd.f32 %v88, %v431
  %v433 = vpop.f32.mrb[0].mxu0
  %v434 = vpop.f32.mrb[0].mxu0
  %v435 = vadd.f32 %v88, %v434
  %v436 = vpop.f32.mrb[0].mxu0
  %437 = vmatprep.mubr.bf16.mxu0 0
  %438 = vmatmul.mubr.bf16.gmra.mrb[0].mxu0 %v278
  %v439 = vpop.f32.mrb[0].mxu0
  %v440 = vadd.f32 %v88, %v439
  %v441 = vpop.f32.mrb[0].mxu0
  %v442 = vpop.f32.mrb[0].mxu0
  %v443 = vadd.f32 %v88, %v442
  %v444 = vpop.f32.mrb[0].mxu0
  %445 = vmatprep.mubr.bf16.mxu0 0
  %446 = vmatmul.mubr.bf16.gmra.mrb[0].mxu0 %v281
  %v447 = vpop.f32.mrb[0].mxu0
  %v448 = vadd.f32 %v88, %v447
  %v449 = vpop.f32.mrb[0].mxu0
  %v450 = vpop.f32.mrb[0].mxu0
  %v451 = vadd.f32 %v88, %v450
  %v452 = vpop.f32.mrb[0].mxu0
  %453 = vmatprep.mubr.bf16.mxu0 0
  %454 = vmatmul.mubr.bf16.gmra.mrb[0].mxu0 %v284
  %v455 = vpop.f32.mrb[0].mxu0
  %v456 = vadd.f32 %v88, %v455
  %v457 = vpop.f32.mrb[0].mxu0
  %v458 = vpop.f32.mrb[0].mxu0
  %v459 = vadd.f32 %v88, %v458
  %v460 = vpop.f32.mrb[0].mxu0
  %461 = vmatprep.mubr.bf16.mxu0 0
  %462 = vmatmul.mubr.bf16.gmra.mrb[0].mxu0 %v287
  %v463 = vpop.f32.mrb[0].mxu0
  %v464 = vadd.f32 %v88, %v463
  %v465 = vpop.f32.mrb[0].mxu0
  %v466 = vpop.f32.mrb[0].mxu0
  %v467 = vadd.f32 %v88, %v466
  %v468 = vpop.f32.mrb[0].mxu0
  %469 = vmatprep.mubr.bf16.mxu0 0
  %470 = vmatmul.mubr.bf16.gmra.mrb[0].mxu0 %v290
  %v471 = vpop.f32.mrb[0].mxu0
  %v472 = vadd.f32 %v88, %v471
  %v473 = vpop.f32.mrb[0].mxu0
  %v474 = vpop.f32.mrb[0].mxu0
  %v475 = vadd.f32 %v88, %v474
  %v476 = vpop.f32.mrb[0].mxu0
  %477 = vmatprep.mubr.bf16.mxu0 0
  %478 = vmatmul.mubr.bf16.gmra.mrb[0].mxu0 %v293
  %v479 = vpop.f32.mrb[0].mxu0
  %v480 = vadd.f32 %v88, %v479
  %v481 = vpop.f32.mrb[0].mxu0
  %v482 = vpop.f32.mrb[0].mxu0
  %v483 = vadd.f32 %v88, %v482
  %v484 = vpop.f32.mrb[0].mxu0
  %485 = vmatprep.mubr.bf16.mxu0 0
  %486 = vmatmul.mubr.bf16.gmra.mrb[0].mxu0 %v296
  %v487 = vpop.f32.mrb[0].mxu0
  %v488 = vadd.f32 %v88, %v487
  %v489 = vpop.f32.mrb[0].mxu0
  %v490 = vpop.f32.mrb[0].mxu0
  %v491 = vadd.f32 %v88, %v490
  %v492 = vpop.f32.mrb[0].mxu0
  %493 = vmatprep.mubr.bf16.mxu0 0
  %494 = vmatmul.mubr.bf16.gmra.mrb[0].mxu0 %v299
  %v495 = vpop.f32.mrb[0].mxu0
  %v496 = vadd.f32 %v88, %v495
  %v497 = vpop.f32.mrb[0].mxu0
  %v498 = vpop.f32.mrb[0].mxu0
  %v499 = vadd.f32 %v88, %v498
  %v500 = vpop.f32.mrb[0].mxu0
  %501 = vmatprep.mubr.bf16.mxu0 0
  %502 = vmatmul.mubr.bf16.gmra.mrb[0].mxu0 %v302
  %v503 = vpop.f32.mrb[0].mxu0
  %v504 = vadd.f32 %v88, %v503
  %v505 = vpop.f32.mrb[0].mxu0
  %v506 = vpop.f32.mrb[0].mxu0
  %v507 = vadd.f32 %v88, %v506
  %v508 = vpop.f32.mrb[0].mxu0
  %509 = vmatprep.mubr.bf16.mxu0 0
  %510 = vmatmul.mubr.bf16.gmra.mrb[0].mxu0 %v305
  %v511 = vpop.f32.mrb[0].mxu0
  %v512 = vadd.f32 %v88, %v511
  %v513 = vpop.f32.mrb[0].mxu0
  %v514 = vpop.f32.mrb[0].mxu0
  %v515 = vadd.f32 %v88, %v514
  %v516 = vpop.f32.mrb[0].mxu0
  %517 = vmatprep.mubr.bf16.mxu0 0
  %518 = vmatmul.mubr.bf16.gmra.mrb[0].mxu0 %v308
  %v519 = vpop.f32.mrb[0].mxu0
  %v520 = vadd.f32 %v88, %v519
  %v521 = vpop.f32.mrb[0].mxu0
  %v522 = vpop.f32.mrb[0].mxu0
  %v523 = vadd.f32 %v88, %v522
  %v524 = vpop.f32.mrb[0].mxu0
  %525 = vmatprep.mubr.bf16.mxu0 0
  %526 = vmatmul.mubr.bf16.gmra.mrb[0].mxu0 %v311
  %v527 = vpop.f32.mrb[0].mxu0
  %v528 = vadd.f32 %v88, %v527
  %v529 = vpop.f32.mrb[0].mxu0
  %v530 = vpop.f32.mrb[0].mxu0
  %v531 = vadd.f32 %v88, %v530
  %v532 = vpop.f32.mrb[0].mxu0
  %533 = vmatprep.mubr.bf16.mxu0 0
  %534 = vmatmul.mubr.bf16.gmra.mrb[0].mxu0 %v314
  %v535 = vpop.f32.mrb[0].mxu0
  %v536 = vadd.f32 %v88, %v535
  %v537 = vpop.f32.mrb[0].mxu0
  %v538 = vpop.f32.mrb[0].mxu0
  %v539 = vadd.f32 %v88, %v538
  %v540 = vpop.f32.mrb[0].mxu0
  %541 = vmatprep.mubr.bf16.mxu0 0
  %542 = vmatmul.mubr.bf16.gmra.mrb[0].mxu0 %v317
  %v543 = vpop.f32.mrb[0].mxu0
  %v544 = vadd.f32 %v88, %v543
  %v545 = vpop.f32.mrb[0].mxu0
  %v546 = vpop.f32.mrb[0].mxu0
  %v547 = vadd.f32 %v88, %v546
  %v548 = vpop.f32.mrb[0].mxu0
  %549 = vmatprep.mubr.bf16.mxu0 0
  %550 = vmatmul.mubr.bf16.gmra.mrb[0].mxu0 %v320
  %v551 = vpop.f32.mrb[0].mxu0
  %v552 = vadd.f32 %v88, %v551
  %v553 = vpop.f32.mrb[0].mxu0
  %v554 = vpop.f32.mrb[0].mxu0
  %v555 = vadd.f32 %v88, %v554
  %v556 = vpop.f32.mrb[0].mxu0
  %557 = vmatprep.mubr.bf16.mxu0 0
  %558 = vmatmul.mubr.bf16.gmra.mrb[0].mxu0 %v323
  %v559 = vpop.f32.mrb[0].mxu0
  %v560 = vadd.f32 %v88, %v559
  %v561 = vpop.f32.mrb[0].mxu0
  %v562 = vpop.f32.mrb[0].mxu0
  %v563 = vadd.f32 %v88, %v562
  %v564 = vpop.f32.mrb[0].mxu0
  %565 = vmatprep.mubr.bf16.mxu0 0
  %566 = vmatmul.mubr.bf16.gmra.mrb[0].mxu0 %v326
  %v567 = vpop.f32.mrb[0].mxu0
  %v568 = vadd.f32 %v88, %v567
  %v569 = vpop.f32.mrb[0].mxu0
  %v570 = vpop.f32.mrb[0].mxu0
  %v571 = vadd.f32 %v88, %v570
  %v572 = vpop.f32.mrb[0].mxu0
  %573 = vmatprep.mubr.bf16.mxu0 0
  %574 = vmatmul.mubr.bf16.gmra.mrb[0].mxu0 %v329
  %v575 = vpop.f32.mrb[0].mxu0
  %v576 = vadd.f32 %v88, %v575
  %v577 = vpop.f32.mrb[0].mxu0
  %v578 = vpop.f32.mrb[0].mxu0
  %v579 = vadd.f32 %v88, %v578
  %v580 = vpop.f32.mrb[0].mxu0
  %581 = vmatprep.mubr.bf16.mxu0 0
  %582 = vmatmul.mubr.bf16.gmra.mrb[0].mxu0 %v332
  %v583 = vpop.f32.mrb[0].mxu0
  %v584 = vadd.f32 %v88, %v583
  %v585 = vpop.f32.mrb[0].mxu0
  %v586 = vpop.f32.mrb[0].mxu0
  %v587 = vadd.f32 %v88, %v586
  %v588 = vpop.f32.mrb[0].mxu0
  %589 = vmatprep.mubr.bf16.mxu0 0
  %590 = vmatmul.mubr.bf16.gmra.mrb[0].mxu0 %v335
  %v591 = vpop.f32.mrb[0].mxu0
  %v592 = vadd.f32 %v88, %v591
  %v593 = vpop.f32.mrb[0].mxu0
  %v594 = vpop.f32.mrb[0].mxu0
  %v595 = vadd.f32 %v88, %v594
  %v596 = vpop.f32.mrb[0].mxu0
  %597 = vmatprep.mubr.bf16.mxu0 0
  %598 = vmatmul.mubr.bf16.gmra.mrb[0].mxu0 %v338
  %v599 = vpop.f32.mrb[0].mxu0
  %v600 = vadd.f32 %v88, %v599
  %v601 = vpop.f32.mrb[0].mxu0
  %v602 = vpop.f32.mrb[0].mxu0
  %v603 = vadd.f32 %v88, %v602
  %v604 = vpop.f32.mrb[0].mxu0
  %605 = vmatprep.mubr.bf16.mxu0 0
  %606 = vmatmul.mubr.bf16.gmra.mrb[0].mxu0 %v341
  %v607 = vpop.f32.mrb[0].mxu0
  %v608 = vadd.f32 %v88, %v607
  %v609 = vpop.f32.mrb[0].mxu0
  %v610 = vpop.f32.mrb[0].mxu0
  %v611 = vadd.f32 %v88, %v610
  %v612 = vpop.f32.mrb[0].mxu0
  %613 = vmatprep.mubr.bf16.mxu0 0
  %614 = vmatmul.mubr.bf16.gmra.mrb[0].mxu0 %v344
  %v615 = vpop.f32.mrb[0].mxu0
  %v616 = vadd.f32 %v88, %v615
  %v617 = vpop.f32.mrb[0].mxu0
  %v618 = vpop.f32.mrb[0].mxu0
  %v619 = vadd.f32 %v88, %v618
  %v620 = vpop.f32.mrb[0].mxu0
  %621 = vmatprep.mubr.bf16.mxu0 0
  %622 = vmatmul.mubr.bf16.gmra.mrb[0].mxu0 %v347
  %v623 = vpop.f32.mrb[0].mxu0
  %v624 = vadd.f32 %v88, %v623
  %v625 = vpop.f32.mrb[0].mxu0
  %v626 = vpop.f32.mrb[0].mxu0
  %v627 = vadd.f32 %v88, %v626
  %v628 = vpop.f32.mrb[0].mxu0
  %629 = vmatprep.mubr.bf16.mxu0 0
  %630 = vmatmul.mubr.bf16.gmra.mrb[0].mxu0 %v350
  %v631 = vpop.f32.mrb[0].mxu0
  %v632 = vadd.f32 %v88, %v631
  %v633 = vpop.f32.mrb[0].mxu0
  %v634 = vpop.f32.mrb[0].mxu0
  %v635 = vadd.f32 %v88, %v634
  %v636 = vpop.f32.mrb[0].mxu0
  %637 = vmatprep.mubr.bf16.mxu0 0
  %638 = vmatmul.mubr.bf16.gmra.mrb[0].mxu0 %v353
  %v639 = vpop.f32.mrb[0].mxu0
  %v640 = vadd.f32 %v88, %v639
  %v641 = vpop.f32.mrb[0].mxu0
  %v642 = vpop.f32.mrb[0].mxu0
  %v643 = vadd.f32 %v88, %v642
  %v644 = vpop.f32.mrb[0].mxu0
  %645 = vmatprep.mubr.bf16.mxu0 0
  %646 = vmatmul.mubr.bf16.gmra.mrb[0].mxu0 %v356
  %v647 = vpop.f32.mrb[0].mxu0
  %v648 = vadd.f32 %v88, %v647
  %v649 = vpop.f32.mrb[0].mxu0
  %v650 = vpop.f32.mrb[0].mxu0
  %v651 = vadd.f32 %v88, %v650
  %v652 = vpop.f32.mrb[0].mxu0
  %653 = vdwg.mxu0
  %v654 = vmax.f32 %v400, 0.0
  %v655 = vmax.f32 %v403, 0.0
  %v656 = vmax.f32 %v408, 0.0
  %v657 = vmax.f32 %v411, 0.0
  %v658 = vmax.f32 %v416, 0.0
  %v659 = vmax.f32 %v419, 0.0
  %v660 = vmax.f32 %v424, 0.0
  %v661 = vmax.f32 %v427, 0.0
  %v662 = vmax.f32 %v432, 0.0
  %v663 = vmax.f32 %v435, 0.0
  %v664 = vmax.f32 %v440, 0.0
  %v665 = vmax.f32 %v443, 0.0
  %v666 = vmax.f32 %v448, 0.0
  %v667 = vmax.f32 %v451, 0.0
  %v668 = vmax.f32 %v456, 0.0
  %v669 = vmax.f32 %v459, 0.0
  %v670 = vmax.f32 %v464, 0.0
  %v671 = vmax.f32 %v467, 0.0
  %v672 = vmax.f32 %v472, 0.0
  %v673 = vmax.f32 %v475, 0.0
  %v674 = vmax.f32 %v480, 0.0
  %v675 = vmax.f32 %v483, 0.0
  %v676 = vmax.f32 %v488, 0.0
  %v677 = vmax.f32 %v491, 0.0
  %v678 = vmax.f32 %v496, 0.0
  %v679 = vmax.f32 %v499, 0.0
  %v680 = vmax.f32 %v504, 0.0
  %v681 = vmax.f32 %v507, 0.0
  %v682 = vmax.f32 %v512, 0.0
  %v683 = vmax.f32 %v515, 0.0
  %v684 = vmax.f32 %v520, 0.0
  %v685 = vmax.f32 %v523, 0.0
  %v686 = vmax.f32 %v528, 0.0
  %v687 = vmax.f32 %v531, 0.0
  %v688 = vmax.f32 %v536, 0.0
  %v689 = vmax.f32 %v539, 0.0
  %v690 = vmax.f32 %v544, 0.0
  %v691 = vmax.f32 %v547, 0.0
  %v692 = vmax.f32 %v552, 0.0
  %v693 = vmax.f32 %v555, 0.0
  %v694 = vmax.f32 %v560, 0.0
  %v695 = vmax.f32 %v563, 0.0
  %v696 = vmax.f32 %v568, 0.0
  %v697 = vmax.f32 %v571, 0.0
  %v698 = vmax.f32 %v576, 0.0
  %v699 = vmax.f32 %v579, 0.0
  %v700 = vmax.f32 %v584, 0.0
  %v701 = vmax.f32 %v587, 0.0
  %v702 = vmax.f32 %v592, 0.0
  %v703 = vmax.f32 %v595, 0.0
  %v704 = vmax.f32 %v600, 0.0
  %v705 = vmax.f32 %v603, 0.0
  %v706 = vmax.f32 %v608, 0.0
  %v707 = vmax.f32 %v611, 0.0
  %v708 = vmax.f32 %v616, 0.0
  %v709 = vmax.f32 %v619, 0.0
  %v710 = vmax.f32 %v624, 0.0
  %v711 = vmax.f32 %v627, 0.0
  %v712 = vmax.f32 %v632, 0.0
  %v713 = vmax.f32 %v635, 0.0
  %v714 = vmax.f32 %v640, 0.0
  %v715 = vmax.f32 %v643, 0.0
  %v716 = vmax.f32 %v648, 0.0
  %v717 = vmax.f32 %v651, 0.0
  %v718 = vpack.c.bf16 %v655, %v654
  %v719 = vpack.c.bf16 %v657, %v656
  %v720 = vpack.c.bf16 %v659, %v658
  %v721 = vpack.c.bf16 %v661, %v660
  %v722 = vpack.c.bf16 %v663, %v662
  %v723 = vpack.c.bf16 %v665, %v664
  %v724 = vpack.c.bf16 %v667, %v666
  %v725 = vpack.c.bf16 %v669, %v668
  %v726 = vpack.c.bf16 %v671, %v670
  %v727 = vpack.c.bf16 %v673, %v672
  %v728 = vpack.c.bf16 %v675, %v674
  %v729 = vpack.c.bf16 %v677, %v676
  %v730 = vpack.c.bf16 %v679, %v678
  %v731 = vpack.c.bf16 %v681, %v680
  %v732 = vpack.c.bf16 %v683, %v682
  %v733 = vpack.c.bf16 %v685, %v684
  %v734 = vpack.c.bf16 %v687, %v686
  %v735 = vpack.c.bf16 %v689, %v688
  %v736 = vpack.c.bf16 %v691, %v690
  %v737 = vpack.c.bf16 %v693, %v692
  %v738 = vpack.c.bf16 %v695, %v694
  %v739 = vpack.c.bf16 %v697, %v696
  %v740 = vpack.c.bf16 %v699, %v698
  %v741 = vpack.c.bf16 %v701, %v700
  %v742 = vpack.c.bf16 %v703, %v702
  %v743 = vpack.c.bf16 %v705, %v704
  %v744 = vpack.c.bf16 %v707, %v706
  %v745 = vpack.c.bf16 %v709, %v708
  %v746 = vpack.c.bf16 %v711, %v710
  %v747 = vpack.c.bf16 %v713, %v712
  %v748 = vpack.c.bf16 %v715, %v714
  %v749 = vpack.c.bf16 %v717, %v716
  %v782 = vunpack.c.l.b16 %v718
  %v783 = vunpack.c.h.b16 %v718
  %v784 = vunpack.c.l.b16 %v719
  %v785 = vunpack.c.h.b16 %v719
  %v786 = vunpack.c.l.b16 %v720
  %v787 = vunpack.c.h.b16 %v720
  %v788 = vunpack.c.l.b16 %v721
  %v789 = vunpack.c.h.b16 %v721
  %v790 = vunpack.c.l.b16 %v722
  %v791 = vunpack.c.h.b16 %v722
  %v792 = vunpack.c.l.b16 %v723
  %v793 = vunpack.c.h.b16 %v723
  %v794 = vunpack.c.l.b16 %v724
  %v795 = vunpack.c.h.b16 %v724
  %v796 = vunpack.c.l.b16 %v725
  %v797 = vunpack.c.h.b16 %v725
  %v798 = vunpack.c.l.b16 %v726
  %v799 = vunpack.c.h.b16 %v726
  %v800 = vunpack.c.l.b16 %v727
  %v801 = vunpack.c.h.b16 %v727
  %v802 = vunpack.c.l.b16 %v728
  %v803 = vunpack.c.h.b16 %v728
  %v804 = vunpack.c.l.b16 %v729
  %v805 = vunpack.c.h.b16 %v729
  %v806 = vunpack.c.l.b16 %v730
  %v807 = vunpack.c.h.b16 %v730
  %v808 = vunpack.c.l.b16 %v731
  %v809 = vunpack.c.h.b16 %v731
  %v810 = vunpack.c.l.b16 %v732
  %v811 = vunpack.c.h.b16 %v732
  %v812 = vunpack.c.l.b16 %v733
  %v813 = vunpack.c.h.b16 %v733
  %v814 = vunpack.c.l.b16 %v734
  %v815 = vunpack.c.h.b16 %v734
  %v816 = vunpack.c.l.b16 %v735
  %v817 = vunpack.c.h.b16 %v735
  %v818 = vunpack.c.l.b16 %v736
  %v819 = vunpack.c.h.b16 %v736
  %v820 = vunpack.c.l.b16 %v737
  %v821 = vunpack.c.h.b16 %v737
  %v822 = vunpack.c.l.b16 %v738
  %v823 = vunpack.c.h.b16 %v738
  %v824 = vunpack.c.l.b16 %v739
  %v825 = vunpack.c.h.b16 %v739
  %v826 = vunpack.c.l.b16 %v740
  %v827 = vunpack.c.h.b16 %v740
  %v828 = vunpack.c.l.b16 %v741
  %v829 = vunpack.c.h.b16 %v741
  %v830 = vunpack.c.l.b16 %v742
  %v831 = vunpack.c.h.b16 %v742
  %v832 = vunpack.c.l.b16 %v743
  %v833 = vunpack.c.h.b16 %v743
  %v834 = vunpack.c.l.b16 %v744
  %v835 = vunpack.c.h.b16 %v744
  %v836 = vunpack.c.l.b16 %v745
  %v837 = vunpack.c.h.b16 %v745
  %v838 = vunpack.c.l.b16 %v746
  %v839 = vunpack.c.h.b16 %v746
  %v840 = vunpack.c.l.b16 %v747
  %v841 = vunpack.c.h.b16 %v747
  %v842 = vunpack.c.l.b16 %v748
  %v843 = vunpack.c.h.b16 %v748
  %v844 = vunpack.c.l.b16 %v749
  %v845 = vunpack.c.h.b16 %v749
  %v846 = vpack.c.b16 %v782, %v782
  %v847 = vpack.c.b16 %v783, %v783
  %v848 = vpack.c.b16 %v784, %v784
  %v849 = vpack.c.b16 %v785, %v785
  %v850 = vpack.c.b16 %v786, %v786
  %v851 = vpack.c.b16 %v787, %v787
  %v852 = vpack.c.b16 %v788, %v788
  %v853 = vpack.c.b16 %v789, %v789
  %v854 = vpack.c.b16 %v790, %v790
  %v855 = vpack.c.b16 %v791, %v791
  %v856 = vpack.c.b16 %v792, %v792
  %v857 = vpack.c.b16 %v793, %v793
  %v858 = vpack.c.b16 %v794, %v794
  %v859 = vpack.c.b16 %v795, %v795
  %v860 = vpack.c.b16 %v796, %v796
  %v861 = vpack.c.b16 %v797, %v797
  %v862 = vpack.c.b16 %v798, %v798
  %v863 = vpack.c.b16 %v799, %v799
  %v864 = vpack.c.b16 %v800, %v800
  %v865 = vpack.c.b16 %v801, %v801
  %v866 = vpack.c.b16 %v802, %v802
  %v867 = vpack.c.b16 %v803, %v803
  %v868 = vpack.c.b16 %v804, %v804
  %v869 = vpack.c.b16 %v805, %v805
  %v870 = vpack.c.b16 %v806, %v806
  %v871 = vpack.c.b16 %v807, %v807
  %v872 = vpack.c.b16 %v808, %v808
  %v873 = vpack.c.b16 %v809, %v809
  %v874 = vpack.c.b16 %v810, %v810
  %v875 = vpack.c.b16 %v811, %v811
  %v876 = vpack.c.b16 %v812, %v812
  %v877 = vpack.c.b16 %v813, %v813
  %v878 = vpack.c.b16 %v814, %v814
  %v879 = vpack.c.b16 %v815, %v815
  %v880 = vpack.c.b16 %v816, %v816
  %v881 = vpack.c.b16 %v817, %v817
  %v882 = vpack.c.b16 %v818, %v818
  %v883 = vpack.c.b16 %v819, %v819
  %v884 = vpack.c.b16 %v820, %v820
  %v885 = vpack.c.b16 %v821, %v821
  %v886 = vpack.c.b16 %v822, %v822
  %v887 = vpack.c.b16 %v823, %v823
  %v888 = vpack.c.b16 %v824, %v824
  %v889 = vpack.c.b16 %v825, %v825
  %v890 = vpack.c.b16 %v826, %v826
  %v891 = vpack.c.b16 %v827, %v827
  %v892 = vpack.c.b16 %v828, %v828
  %v893 = vpack.c.b16 %v829, %v829
  %v894 = vpack.c.b16 %v830, %v830
  %v895 = vpack.c.b16 %v831, %v831
  %v896 = vpack.c.b16 %v832, %v832
  %v897 = vpack.c.b16 %v833, %v833
  %v898 = vpack.c.b16 %v834, %v834
  %v899 = vpack.c.b16 %v835, %v835
  %v900 = vpack.c.b16 %v836, %v836
  %v901 = vpack.c.b16 %v837, %v837
  %v902 = vpack.c.b16 %v838, %v838
  %v903 = vpack.c.b16 %v839, %v839
  %v904 = vpack.c.b16 %v840, %v840
  %v905 = vpack.c.b16 %v841, %v841
  %v906 = vpack.c.b16 %v842, %v842
  %v907 = vpack.c.b16 %v843, %v843
  %v908 = vpack.c.b16 %v844, %v844
  %v909 = vpack.c.b16 %v845, %v845
  %vm974 = vcmask 60416
  %975 = vst.msk [vmem:[%s3] sm:$0xf] %vm974, %v846
  %976 = vst.msk [vmem:[%s3 + $0x4] sm:$0xf] %vm974, %v847
  %977 = vst.msk [vmem:[%s3 + $0x8] sm:$0xf] %vm974, %v848
  %978 = vst.msk [vmem:[%s3 + $0xc] sm:$0xf] %vm974, %v849
  %979 = vst.msk [vmem:[%s3 + $0x10] sm:$0xf] %vm974, %v850
  %980 = vst.msk [vmem:[%s3 + $0x14] sm:$0xf] %vm974, %v851
  %981 = vst.msk [vmem:[%s3 + $0x18] sm:$0xf] %vm974, %v852
  %982 = vst.msk [vmem:[%s3 + $0x1c] sm:$0xf] %vm974, %v853
  %983 = vst.msk [vmem:[%s3 + $0x20] sm:$0xf] %vm974, %v854
  %984 = vst.msk [vmem:[%s3 + $0x24] sm:$0xf] %vm974, %v855
  %985 = vst.msk [vmem:[%s3 + $0x28] sm:$0xf] %vm974, %v856
  %986 = vst.msk [vmem:[%s3 + $0x2c] sm:$0xf] %vm974, %v857
  %987 = vst.msk [vmem:[%s3 + $0x30] sm:$0xf] %vm974, %v858
  %988 = vst.msk [vmem:[%s3 + $0x34] sm:$0xf] %vm974, %v859
  %989 = vst.msk [vmem:[%s3 + $0x38] sm:$0xf] %vm974, %v860
  %990 = vst.msk [vmem:[%s3 + $0x3c] sm:$0xf] %vm974, %v861
  %991 = vst.msk [vmem:[%s3 + $0x40] sm:$0xf] %vm974, %v862
  %992 = vst.msk [vmem:[%s3 + $0x44] sm:$0xf] %vm974, %v863
  %993 = vst.msk [vmem:[%s3 + $0x48] sm:$0xf] %vm974, %v864
  %994 = vst.msk [vmem:[%s3 + $0x4c] sm:$0xf] %vm974, %v865
  %995 = vst.msk [vmem:[%s3 + $0x50] sm:$0xf] %vm974, %v866
  %996 = vst.msk [vmem:[%s3 + $0x54] sm:$0xf] %vm974, %v867
  %997 = vst.msk [vmem:[%s3 + $0x58] sm:$0xf] %vm974, %v868
  %998 = vst.msk [vmem:[%s3 + $0x5c] sm:$0xf] %vm974, %v869
  %999 = vst.msk [vmem:[%s3 + $0x60] sm:$0xf] %vm974, %v870
  %1000 = vst.msk [vmem:[%s3 + $0x64] sm:$0xf] %vm974, %v871
  %1001 = vst.msk [vmem:[%s3 + $0x68] sm:$0xf] %vm974, %v872
  %1002 = vst.msk [vmem:[%s3 + $0x6c] sm:$0xf] %vm974, %v873
  %1003 = vst.msk [vmem:[%s3 + $0x70] sm:$0xf] %vm974, %v874
  %1004 = vst.msk [vmem:[%s3 + $0x74] sm:$0xf] %vm974, %v875
  %1005 = vst.msk [vmem:[%s3 + $0x78] sm:$0xf] %vm974, %v876
  %1006 = vst.msk [vmem:[%s3 + $0x7c] sm:$0xf] %vm974, %v877
  %1007 = vst.msk [vmem:[%s3 + $0x80] sm:$0xf] %vm974, %v878
  %1008 = vst.msk [vmem:[%s3 + $0x84] sm:$0xf] %vm974, %v879
  %1009 = vst.msk [vmem:[%s3 + $0x88] sm:$0xf] %vm974, %v880
  %1010 = vst.msk [vmem:[%s3 + $0x8c] sm:$0xf] %vm974, %v881
  %1011 = vst.msk [vmem:[%s3 + $0x90] sm:$0xf] %vm974, %v882
  %1012 = vst.msk [vmem:[%s3 + $0x94] sm:$0xf] %vm974, %v883
  %1013 = vst.msk [vmem:[%s3 + $0x98] sm:$0xf] %vm974, %v884
  %1014 = vst.msk [vmem:[%s3 + $0x9c] sm:$0xf] %vm974, %v885
  %1015 = vst.msk [vmem:[%s3 + $0xa0] sm:$0xf] %vm974, %v886
  %1016 = vst.msk [vmem:[%s3 + $0xa4] sm:$0xf] %vm974, %v887
  %1017 = vst.msk [vmem:[%s3 + $0xa8] sm:$0xf] %vm974, %v888
  %1018 = vst.msk [vmem:[%s3 + $0xac] sm:$0xf] %vm974, %v889
  %1019 = vst.msk [vmem:[%s3 + $0xb0] sm:$0xf] %vm974, %v890
  %1020 = vst.msk [vmem:[%s3 + $0xb4] sm:$0xf] %vm974, %v891
  %1021 = vst.msk [vmem:[%s3 + $0xb8] sm:$0xf] %vm974, %v892
  %1022 = vst.msk [vmem:[%s3 + $0xbc] sm:$0xf] %vm974, %v893
  %1023 = vst.msk [vmem:[%s3 + $0xc0] sm:$0xf] %vm974, %v894
  %1024 = vst.msk [vmem:[%s3 + $0xc4] sm:$0xf] %vm974, %v895
  %1025 = vst.msk [vmem:[%s3 + $0xc8] sm:$0xf] %vm974, %v896
  %1026 = vst.msk [vmem:[%s3 + $0xcc] sm:$0xf] %vm974, %v897
  %1027 = vst.msk [vmem:[%s3 + $0xd0] sm:$0xf] %vm974, %v898
  %1028 = vst.msk [vmem:[%s3 + $0xd4] sm:$0xf] %vm974, %v899
  %1029 = vst.msk [vmem:[%s3 + $0xd8] sm:$0xf] %vm974, %v900
  %1030 = vst.msk [vmem:[%s3 + $0xdc] sm:$0xf] %vm974, %v901
  %1031 = vst.msk [vmem:[%s3 + $0xe0] sm:$0xf] %vm974, %v902
  %1032 = vst.msk [vmem:[%s3 + $0xe4] sm:$0xf] %vm974, %v903
  %1033 = vst.msk [vmem:[%s3 + $0xe8] sm:$0xf] %vm974, %v904
  %1034 = vst.msk [vmem:[%s3 + $0xec] sm:$0xf] %vm974, %v905
  %1035 = vst.msk [vmem:[%s3 + $0xf0] sm:$0xf] %vm974, %v906
  %1036 = vst.msk [vmem:[%s3 + $0xf4] sm:$0xf] %vm974, %v907
  %1037 = vst.msk [vmem:[%s3 + $0xf8] sm:$0xf] %vm974, %v908
  %1038 = vst.msk [vmem:[%s3 + $0xfc] sm:$0xf] %vm974, %v909
  // Predicated region
  $region14: #{conv_stem_forward.5} parent=0 // pred_check
    _
  $region15: #{conv_stem_forward.5} parent=0 // pred_check_branch
    %1040 = sbr.rel (0) target = $region17
  $region16: #{conv_stem_forward.5} parent=0 // pred_region
    _
  $region17: #{conv_stem_forward.5} parent=0 // pred_fallthru
    _
  // Predicated region
  $region18: #{conv_stem_forward.5} parent=0 // pred_check
    _
  $region19: #{conv_stem_forward.5} parent=0 // pred_check_branch
    %1042 = sbr.rel (0) target = $region21
  $region20: #{conv_stem_forward.5} parent=0 // pred_region
    _
  $region21: #{conv_stem_forward.5} parent=0 // pred_fallthru
    _

// kernel: conv_stem_forward.6
$region0: #{conv_stem_forward.6}
  #allocation0 [shape = 'u32[]', space=smem, size = 0x4, offset = 0x4, fixed_abs, tag = 'smem constant byte address 0x4 - core index']
  #allocation1 [shape = 'u32[144,128]{1,0:T(1,128)}', space=vmem, size = 0x12000, scoped, tag = 'internal scratch']
  %s0 = inlined_call_operand.vmem [shape: bf16[128,72], index: 0, kind: input, shape index: {}]
  %s1 = inlined_call_operand.vmem [shape: bf16[72,16], index: 1, kind: input, shape index: {}]
  %s2 = inlined_call_operand.vmem [shape: f32[1,16], index: 2, kind: input, shape index: {}]
  %s3 = inlined_call_operand.vmem [shape: bf16[128,16], index: 3, kind: output, shape index: {}]
  %s4 = sld [smem:[#allocation0]]
  $region22: #{conv_stem_forward.6} parent=0
    _
  %s6 = ssub.s32 1, %s4
  %s7 = scalar_select 0, %s6, %s4
  // Predicated region
  $region2: #{conv_stem_forward.6} parent=0 // pred_check
    _
  $region3: #{conv_stem_forward.6} parent=0 // pred_check_branch
    %9 = sbr.rel (0) target = $region5
  $region4: #{conv_stem_forward.6} parent=0 // pred_region
    _
  $region5: #{conv_stem_forward.6} parent=0 // pred_fallthru
    _
  // Predicated region
  $region6: #{conv_stem_forward.6} parent=0 // pred_check
    _
  $region7: #{conv_stem_forward.6} parent=0 // pred_check_branch
    %11 = sbr.rel (0) target = $region9
  $region8: #{conv_stem_forward.6} parent=0 // pred_region
    _
  $region9: #{conv_stem_forward.6} parent=0 // pred_fallthru
    _
  // Predicated region
  $region10: #{conv_stem_forward.6} parent=0 // pred_check
    _
  $region11: #{conv_stem_forward.6} parent=0 // pred_check_branch
    %13 = sbr.rel (0) target = $region13
  $region12: #{conv_stem_forward.6} parent=0 // pred_region
    _
  $region13: #{conv_stem_forward.6} parent=0 // pred_fallthru
    _
  %v15 = vld [vmem:[%s0] sm:$0xf]
  %v16 = vld [vmem:[%s0 + $0x4] sm:$0xf]
  %v17 = vld [vmem:[%s0 + $0x8] sm:$0xf]
  %v18 = vld [vmem:[%s0 + $0xc] sm:$0xf]
  %v19 = vld [vmem:[%s0 + $0x10] sm:$0xf]
  %v20 = vld [vmem:[%s0 + $0x14] sm:$0xf]
  %v21 = vld [vmem:[%s0 + $0x18] sm:$0xf]
  %v22 = vld [vmem:[%s0 + $0x1c] sm:$0xf]
  %v23 = vld [vmem:[%s0 + $0x20] sm:$0xf]
  %v24 = vld [vmem:[%s0 + $0x24] sm:$0xf]
  %v25 = vld [vmem:[%s0 + $0x28] sm:$0xf]
  %v26 = vld [vmem:[%s0 + $0x2c] sm:$0xf]
  %v27 = vld [vmem:[%s0 + $0x30] sm:$0xf]
  %v28 = vld [vmem:[%s0 + $0x34] sm:$0xf]
  %v29 = vld [vmem:[%s0 + $0x38] sm:$0xf]
  %v30 = vld [vmem:[%s0 + $0x3c] sm:$0xf]
  %v31 = vld [vmem:[%s1] sm:$0xf]
  %v32 = vld [vmem:[%s1 + $0x4] sm:$0xf]
  %v33 = vld [vmem:[%s1 + $0x8] sm:$0xf]
  %v34 = vld [vmem:[%s1 + $0xc] sm:$0xf]
  %v35 = vld [vmem:[%s1 + $0x10] sm:$0xf]
  %v36 = vld [vmem:[%s1 + $0x14] sm:$0xf]
  %v37 = vld [vmem:[%s1 + $0x18] sm:$0xf]
  %v38 = vld [vmem:[%s1 + $0x1c] sm:$0xf]
  %v39 = vld [vmem:[%s1 + $0x20] sm:$0xf]
  %v40 = vld [vmem:[%s2] sm:$0x1]
  %v42 = vlaneseq
  %v43 = vshrl.u32 %v42, 7
  %v44 = vsub.s32 0, %v43
  %v45 = vrot.slane %v40, %v44
  %v63 = vunpack.c.l.b16 %v15
  %v64 = vunpack.c.l.b16 %v16
  %v65 = vunpack.c.l.b16 %v17
  %v66 = vunpack.c.l.b16 %v18
  %v67 = vunpack.c.l.b16 %v19
  %v68 = vunpack.c.l.b16 %v20
  %v69 = vunpack.c.l.b16 %v21
  %v70 = vunpack.c.l.b16 %v22
  %v71 = vunpack.c.l.b16 %v23
  %v72 = vunpack.c.l.b16 %v24
  %v73 = vunpack.c.l.b16 %v25
  %v74 = vunpack.c.l.b16 %v26
  %v75 = vunpack.c.l.b16 %v27
  %v76 = vunpack.c.l.b16 %v28
  %v77 = vunpack.c.l.b16 %v29
  %v78 = vunpack.c.l.b16 %v30
  %v79 = vpack.c.b16 %v64, %v63
  %v80 = vpack.c.b16 %v66, %v65
  %v81 = vpack.c.b16 %v68, %v67
  %v82 = vpack.c.b16 %v70, %v69
  %v83 = vpack.c.b16 %v72, %v71
  %v84 = vpack.c.b16 %v74, %v73
  %v85 = vpack.c.b16 %v76, %v75
  %v86 = vpack.c.b16 %v78, %v77
  %v96 = vunpack.c.l.b16 %v31
  %v97 = vunpack.c.l.b16 %v32
  %v98 = vunpack.c.l.b16 %v33
  %v99 = vunpack.c.l.b16 %v34
  %v100 = vunpack.c.l.b16 %v35
  %v101 = vunpack.c.l.b16 %v36
  %v102 = vunpack.c.l.b16 %v37
  %v103 = vunpack.c.l.b16 %v38
  %v104 = vunpack.c.l.b16 %v39
  %v105 = vpack.c.b16 %v97, %v96
  %v106 = vpack.c.b16 %v99, %v98
  %v107 = vpack.c.b16 %v101, %v100
  %v108 = vpack.c.b16 %v103, %v102
  %v109 = vpack.c.b16 %v104, %v104
  %vm114 = vcmask 588800
  %v116 = vsel %vm114, %v79, 0
  %v119 = vsel %vm114, %v80, 0
  %v122 = vsel %vm114, %v81, 0
  %v125 = vsel %vm114, %v82, 0
  %v128 = vsel %vm114, %v83, 0
  %v131 = vsel %vm114, %v84, 0
  %v134 = vsel %vm114, %v85, 0
  %v137 = vsel %vm114, %v86, 0
  %vm139 = vcmask 1043456
  %v141 = vsel %vm139, %v109, 0
  %143 = vmatprep.subr.bf16.mxu0 0
  %144 = vmatpush1.bf16.msra.mxu0 %v105
  %145 = vmatprep.subr.bf16.mxu0 0
  %146 = vmatpush1.bf16.msra.mxu0 %v106
  %147 = vmatprep.subr.bf16.mxu0 0
  %148 = vmatpush1.bf16.msra.mxu0 %v107
  %149 = vmatprep.subr.bf16.mxu0 0
  %150 = vmatpush1.bf16.msra.mxu0 %v108
  %151 = vmatprep.subr.bf16.mxu0 0
  %152 = vmatpush1.bf16.msra.mxu0 %v141
  %153 = vmatprep.subr.bf16.mxu0 0
  %154 = vmatpush1.bf16.msra.mxu0 0
  %155 = vmatprep.subr.bf16.mxu0 0
  %156 = vmatpush1.bf16.msra.mxu0 0
  %157 = vmatprep.subr.bf16.mxu0 0
  %158 = vmatpush1.bf16.msra.mxu0 0
  %159 = vmatprep.subr.bf16.mxu0 0
  %160 = vmatpush1.bf16.msra.mxu0 0
  %161 = vmatprep.subr.bf16.mxu0 0
  %162 = vmatpush1.bf16.msra.mxu0 0
  %163 = vmatprep.subr.bf16.mxu0 0
  %164 = vmatpush1.bf16.msra.mxu0 0
  %165 = vmatprep.subr.bf16.mxu0 0
  %166 = vmatpush1.bf16.msra.mxu0 0
  %167 = vmatprep.subr.bf16.mxu0 0
  %168 = vmatpush1.bf16.msra.mxu0 0
  %169 = vmatprep.subr.bf16.mxu0 0
  %170 = vmatpush1.bf16.msra.mxu0 0
  %171 = vmatprep.subr.bf16.mxu0 0
  %172 = vmatpush1.bf16.msra.mxu0 0
  %173 = vmatprep.subr.bf16.mxu0 0
  %174 = vmatpush1.bf16.msra.mxu0 0
  %175 = vmatprep.mubr.bf16.mxu0 0
  %176 = vmatmul.mubr.bf16.gmra.mrb[0].mxu0 %v116
  %v177 = vpop.f32.mrb[0].mxu0
  %v178 = vadd.f32 %v45, %v177
  %v179 = vpop.f32.mrb[0].mxu0
  %v180 = vpop.f32.mrb[0].mxu0
  %v181 = vadd.f32 %v45, %v180
  %v182 = vpop.f32.mrb[0].mxu0
  %183 = vmatprep.mubr.bf16.mxu0 0
  %184 = vmatmul.mubr.bf16.gmra.mrb[0].mxu0 %v119
  %v185 = vpop.f32.mrb[0].mxu0
  %v186 = vadd.f32 %v45, %v185
  %v187 = vpop.f32.mrb[0].mxu0
  %v188 = vpop.f32.mrb[0].mxu0
  %v189 = vadd.f32 %v45, %v188
  %v190 = vpop.f32.mrb[0].mxu0
  %191 = vmatprep.mubr.bf16.mxu0 0
  %192 = vmatmul.mubr.bf16.gmra.mrb[0].mxu0 %v122
  %v193 = vpop.f32.mrb[0].mxu0
  %v194 = vadd.f32 %v45, %v193
  %v195 = vpop.f32.mrb[0].mxu0
  %v196 = vpop.f32.mrb[0].mxu0
  %v197 = vadd.f32 %v45, %v196
  %v198 = vpop.f32.mrb[0].mxu0
  %199 = vmatprep.mubr.bf16.mxu0 0
  %200 = vmatmul.mubr.bf16.gmra.mrb[0].mxu0 %v125
  %v201 = vpop.f32.mrb[0].mxu0
  %v202 = vadd.f32 %v45, %v201
  %v203 = vpop.f32.mrb[0].mxu0
  %v204 = vpop.f32.mrb[0].mxu0
  %v205 = vadd.f32 %v45, %v204
  %v206 = vpop.f32.mrb[0].mxu0
  %207 = vmatprep.mubr.bf16.mxu0 0
  %208 = vmatmul.mubr.bf16.gmra.mrb[0].mxu0 %v128
  %v209 = vpop.f32.mrb[0].mxu0
  %v210 = vadd.f32 %v45, %v209
  %v211 = vpop.f32.mrb[0].mxu0
  %v212 = vpop.f32.mrb[0].mxu0
  %v213 = vadd.f32 %v45, %v212
  %v214 = vpop.f32.mrb[0].mxu0
  %215 = vmatprep.mubr.bf16.mxu0 0
  %216 = vmatmul.mubr.bf16.gmra.mrb[0].mxu0 %v131
  %v217 = vpop.f32.mrb[0].mxu0
  %v218 = vadd.f32 %v45, %v217
  %v219 = vpop.f32.mrb[0].mxu0
  %v220 = vpop.f32.mrb[0].mxu0
  %v221 = vadd.f32 %v45, %v220
  %v222 = vpop.f32.mrb[0].mxu0
  %223 = vmatprep.mubr.bf16.mxu0 0
  %224 = vmatmul.mubr.bf16.gmra.mrb[0].mxu0 %v134
  %v225 = vpop.f32.mrb[0].mxu0
  %v226 = vadd.f32 %v45, %v225
  %v227 = vpop.f32.mrb[0].mxu0
  %v228 = vpop.f32.mrb[0].mxu0
  %v229 = vadd.f32 %v45, %v228
  %v230 = vpop.f32.mrb[0].mxu0
  %231 = vmatprep.mubr.bf16.mxu0 0
  %232 = vmatmul.mubr.bf16.gmra.mrb[0].mxu0 %v137
  %v233 = vpop.f32.mrb[0].mxu0
  %v234 = vadd.f32 %v45, %v233
  %v235 = vpop.f32.mrb[0].mxu0
  %v236 = vpop.f32.mrb[0].mxu0
  %v237 = vadd.f32 %v45, %v236
  %v238 = vpop.f32.mrb[0].mxu0
  %239 = vdwg.mxu0
  %v240 = vmax.f32 %v178, 0.0
  %v241 = vmax.f32 %v181, 0.0
  %v242 = vmax.f32 %v186, 0.0
  %v243 = vmax.f32 %v189, 0.0
  %v244 = vmax.f32 %v194, 0.0
  %v245 = vmax.f32 %v197, 0.0
  %v246 = vmax.f32 %v202, 0.0
  %v247 = vmax.f32 %v205, 0.0
  %v248 = vmax.f32 %v210, 0.0
  %v249 = vmax.f32 %v213, 0.0
  %v250 = vmax.f32 %v218, 0.0
  %v251 = vmax.f32 %v221, 0.0
  %v252 = vmax.f32 %v226, 0.0
  %v253 = vmax.f32 %v229, 0.0
  %v254 = vmax.f32 %v234, 0.0
  %v255 = vmax.f32 %v237, 0.0
  %v256 = vpack.c.bf16 %v241, %v240
  %v257 = vpack.c.bf16 %v243, %v242
  %v258 = vpack.c.bf16 %v245, %v244
  %v259 = vpack.c.bf16 %v247, %v246
  %v260 = vpack.c.bf16 %v249, %v248
  %v261 = vpack.c.bf16 %v251, %v250
  %v262 = vpack.c.bf16 %v253, %v252
  %v263 = vpack.c.bf16 %v255, %v254
  %v272 = vunpack.c.l.b16 %v256
  %v273 = vunpack.c.h.b16 %v256
  %v274 = vunpack.c.l.b16 %v257
  %v275 = vunpack.c.h.b16 %v257
  %v276 = vunpack.c.l.b16 %v258
  %v277 = vunpack.c.h.b16 %v258
  %v278 = vunpack.c.l.b16 %v259
  %v279 = vunpack.c.h.b16 %v259
  %v280 = vunpack.c.l.b16 %v260
  %v281 = vunpack.c.h.b16 %v260
  %v282 = vunpack.c.l.b16 %v261
  %v283 = vunpack.c.h.b16 %v261
  %v284 = vunpack.c.l.b16 %v262
  %v285 = vunpack.c.h.b16 %v262
  %v286 = vunpack.c.l.b16 %v263
  %v287 = vunpack.c.h.b16 %v263
  %v288 = vpack.c.b16 %v272, %v272
  %v289 = vpack.c.b16 %v273, %v273
  %v290 = vpack.c.b16 %v274, %v274
  %v291 = vpack.c.b16 %v275, %v275
  %v292 = vpack.c.b16 %v276, %v276
  %v293 = vpack.c.b16 %v277, %v277
  %v294 = vpack.c.b16 %v278, %v278
  %v295 = vpack.c.b16 %v279, %v279
  %v296 = vpack.c.b16 %v280, %v280
  %v297 = vpack.c.b16 %v281, %v281
  %v298 = vpack.c.b16 %v282, %v282
  %v299 = vpack.c.b16 %v283, %v283
  %v300 = vpack.c.b16 %v284, %v284
  %v301 = vpack.c.b16 %v285, %v285
  %v302 = vpack.c.b16 %v286, %v286
  %v303 = vpack.c.b16 %v287, %v287
  %vm320 = vcmask 125952
  %321 = vst.msk [vmem:[%s3] sm:$0xf] %vm320, %v288
  %322 = vst.msk [vmem:[%s3 + $0x4] sm:$0xf] %vm320, %v289
  %323 = vst.msk [vmem:[%s3 + $0x8] sm:$0xf] %vm320, %v290
  %324 = vst.msk [vmem:[%s3 + $0xc] sm:$0xf] %vm320, %v291
  %325 = vst.msk [vmem:[%s3 + $0x10] sm:$0xf] %vm320, %v292
  %326 = vst.msk [vmem:[%s3 + $0x14] sm:$0xf] %vm320, %v293
  %327 = vst.msk [vmem:[%s3 + $0x18] sm:$0xf] %vm320, %v294
  %328 = vst.msk [vmem:[%s3 + $0x1c] sm:$0xf] %vm320, %v295
  %329 = vst.msk [vmem:[%s3 + $0x20] sm:$0xf] %vm320, %v296
  %330 = vst.msk [vmem:[%s3 + $0x24] sm:$0xf] %vm320, %v297
  %331 = vst.msk [vmem:[%s3 + $0x28] sm:$0xf] %vm320, %v298
  %332 = vst.msk [vmem:[%s3 + $0x2c] sm:$0xf] %vm320, %v299
  %333 = vst.msk [vmem:[%s3 + $0x30] sm:$0xf] %vm320, %v300
  %334 = vst.msk [vmem:[%s3 + $0x34] sm:$0xf] %vm320, %v301
  %335 = vst.msk [vmem:[%s3 + $0x38] sm:$0xf] %vm320, %v302
  %336 = vst.msk [vmem:[%s3 + $0x3c] sm:$0xf] %vm320, %v303
  // Predicated region
  $region14: #{conv_stem_forward.6} parent=0 // pred_check
    _
  $region15: #{conv_stem_forward.6} parent=0 // pred_check_branch
    %338 = sbr.rel (0) target = $region17
  $region16: #{conv_stem_forward.6} parent=0 // pred_region
    _
  $region17: #{conv_stem_forward.6} parent=0 // pred_fallthru
    _
  // Predicated region
  $region18: #{conv_stem_forward.6} parent=0 // pred_check
    _
  $region19: #{conv_stem_forward.6} parent=0 // pred_check_branch
    %340 = sbr.rel (0) target = $region21
  $region20: #{conv_stem_forward.6} parent=0 // pred_region
    _
  $region21: #{conv_stem_forward.6} parent=0 // pred_fallthru
    _

// kernel: conv_stem_forward.7
$region0: #{conv_stem_forward.7}
  #allocation0 [shape = 'u32[]', space=smem, size = 0x4, offset = 0x4, fixed_abs, tag = 'smem constant byte address 0x4 - core index']
  #allocation1 [shape = 'u32[144,128]{1,0:T(1,128)}', space=vmem, size = 0x12000, scoped, tag = 'internal scratch']
  %s0 = inlined_call_operand.vmem [shape: bf16[32,144], index: 0, kind: input, shape index: {}]
  %s1 = inlined_call_operand.vmem [shape: bf16[144,32], index: 1, kind: input, shape index: {}]
  %s2 = inlined_call_operand.vmem [shape: f32[1,32], index: 2, kind: input, shape index: {}]
  %s3 = inlined_call_operand.vmem [shape: bf16[32,32], index: 3, kind: output, shape index: {}]
  %s4 = sld [smem:[#allocation0]]
  $region22: #{conv_stem_forward.7} parent=0
    _
  %s6 = ssub.s32 1, %s4
  %s7 = scalar_select 0, %s6, %s4
  // Predicated region
  $region2: #{conv_stem_forward.7} parent=0 // pred_check
    _
  $region3: #{conv_stem_forward.7} parent=0 // pred_check_branch
    %9 = sbr.rel (0) target = $region5
  $region4: #{conv_stem_forward.7} parent=0 // pred_region
    _
  $region5: #{conv_stem_forward.7} parent=0 // pred_fallthru
    _
  // Predicated region
  $region6: #{conv_stem_forward.7} parent=0 // pred_check
    _
  $region7: #{conv_stem_forward.7} parent=0 // pred_check_branch
    %11 = sbr.rel (0) target = $region9
  $region8: #{conv_stem_forward.7} parent=0 // pred_region
    _
  $region9: #{conv_stem_forward.7} parent=0 // pred_fallthru
    _
  // Predicated region
  $region10: #{conv_stem_forward.7} parent=0 // pred_check
    _
  $region11: #{conv_stem_forward.7} parent=0 // pred_check_branch
    %13 = sbr.rel (0) target = $region13
  $region12: #{conv_stem_forward.7} parent=0 // pred_region
    _
  $region13: #{conv_stem_forward.7} parent=0 // pred_fallthru
    _
  %v15 = vld [vmem:[%s0] sm:$0xff]
  %v16 = vld [vmem:[%s0 + $0x8] sm:$0xff]
  %v17 = vld [vmem:[%s0 + $0x10] sm:$0xff]
  %v18 = vld [vmem:[%s0 + $0x18] sm:$0xff]
  %v19 = vld [vmem:[%s1] sm:$0xf]
  %v20 = vld [vmem:[%s1 + $0x4] sm:$0xf]
  %v21 = vld [vmem:[%s1 + $0x8] sm:$0xf]
  %v22 = vld [vmem:[%s1 + $0xc] sm:$0xf]
  %v23 = vld [vmem:[%s1 + $0x10] sm:$0xf]
  %v24 = vld [vmem:[%s1 + $0x14] sm:$0xf]
  %v25 = vld [vmem:[%s1 + $0x18] sm:$0xf]
  %v26 = vld [vmem:[%s1 + $0x1c] sm:$0xf]
  %v27 = vld [vmem:[%s1 + $0x20] sm:$0xf]
  %v28 = vld [vmem:[%s1 + $0x24] sm:$0xf]
  %v29 = vld [vmem:[%s1 + $0x28] sm:$0xf]
  %v30 = vld [vmem:[%s1 + $0x2c] sm:$0xf]
  %v31 = vld [vmem:[%s1 + $0x30] sm:$0xf]
  %v32 = vld [vmem:[%s1 + $0x34] sm:$0xf]
  %v33 = vld [vmem:[%s1 + $0x38] sm:$0xf]
  %v34 = vld [vmem:[%s1 + $0x3c] sm:$0xf]
  %v35 = vld [vmem:[%s1 + $0x40] sm:$0xf]
  %v36 = vld [vmem:[%s1 + $0x44] sm:$0xf]
  %v37 = vld [vmem:[%s2] sm:$0x1]
  %v39 = vlaneseq
  %v40 = vshrl.u32 %v39, 7
  %v41 = vsub.s32 0, %v40
  %v42 = vrot.slane %v37, %v41
  %v48 = vunpack.c.l.b16 %v15
  %v49 = vunpack.c.h.b16 %v15
  %v50 = vunpack.c.l.b16 %v16
  %v51 = vunpack.c.h.b16 %v16
  %v52 = vunpack.c.l.b16 %v17
  %v53 = vunpack.c.h.b16 %v17
  %v54 = vunpack.c.l.b16 %v18
  %v55 = vunpack.c.h.b16 %v18
  %v56 = vpack.c.b16 %v50, %v48
  %v57 = vpack.c.b16 %v51, %v49
  %v58 = vpack.c.b16 %v54, %v52
  %v59 = vpack.c.b16 %v55, %v53
  %v80 = vunpack.c.l.b16 %v19
  %v81 = vunpack.c.l.b16 %v20
  %v82 = vunpack.c.l.b16 %v21
  %v83 = vunpack.c.l.b16 %v22
  %v84 = vunpack.c.l.b16 %v23
  %v85 = vunpack.c.l.b16 %v24
  %v86 = vunpack.c.l.b16 %v25
  %v87 = vunpack.c.l.b16 %v26
  %v88 = vunpack.c.l.b16 %v27
  %v89 = vunpack.c.l.b16 %v28
  %v90 = vunpack.c.l.b16 %v29
  %v91 = vunpack.c.l.b16 %v30
  %v92 = vunpack.c.l.b16 %v31
  %v93 = vunpack.c.l.b16 %v32
  %v94 = vunpack.c.l.b16 %v33
  %v95 = vunpack.c.l.b16 %v34
  %v96 = vunpack.c.l.b16 %v35
  %v97 = vunpack.c.l.b16 %v36
  %v98 = vpack.c.b16 %v81, %v80
  %v99 = vpack.c.b16 %v83, %v82
  %v100 = vpack.c.b16 %v85, %v84
  %v101 = vpack.c.b16 %v87, %v86
  %v102 = vpack.c.b16 %v89, %v88
  %v103 = vpack.c.b16 %v91, %v90
  %v104 = vpack.c.b16 %v93, %v92
  %v105 = vpack.c.b16 %v95, %v94
  %v106 = vpack.c.b16 %v97, %v96
  %vm116 = vcmask 130048
  %v118 = vsel %vm116, %v57, 0
  %v121 = vsel %vm116, %v59, 0
  %123 = vmatprep.subr.bf16.mxu0 0
  %124 = vmatpush1.bf16.msra.mxu0 %v98
  %125 = vmatprep.subr.bf16.mxu0 0
  %126 = vmatpush1.bf16.msra.mxu0 %v99
  %127 = vmatprep.subr.bf16.mxu0 0
  %128 = vmatpush1.bf16.msra.mxu0 %v100
  %129 = vmatprep.subr.bf16.mxu0 0
  %130 = vmatpush1.bf16.msra.mxu0 %v101
  %131 = vmatprep.subr.bf16.mxu0 0
  %132 = vmatpush1.bf16.msra.mxu0 %v102
  %133 = vmatprep.subr.bf16.mxu0 0
  %134 = vmatpush1.bf16.msra.mxu0 %v103
  %135 = vmatprep.subr.bf16.mxu0 0
  %136 = vmatpush1.bf16.msra.mxu0 %v104
  %137 = vmatprep.subr.bf16.mxu0 0
  %138 = vmatpush1.bf16.msra.mxu0 %v105
  %139 = vmatprep.subr.bf16.mxu0 0
  %140 = vmatpush1.bf16.msra.mxu0 %v106
  %141 = vmatprep.subr.bf16.mxu0 0
  %142 = vmatpush1.bf16.msra.mxu0 0
  %143 = vmatprep.subr.bf16.mxu0 0
  %144 = vmatpush1.bf16.msra.mxu0 0
  %145 = vmatprep.subr.bf16.mxu0 0
  %146 = vmatpush1.bf16.msra.mxu0 0
  %147 = vmatprep.subr.bf16.mxu0 0
  %148 = vmatpush1.bf16.msra.mxu0 0
  %149 = vmatprep.subr.bf16.mxu0 0
  %150 = vmatpush1.bf16.msra.mxu0 0
  %151 = vmatprep.subr.bf16.mxu0 0
  %152 = vmatpush1.bf16.msra.mxu0 0
  %153 = vmatprep.subr.bf16.mxu0 0
  %154 = vmatpush1.bf16.msra.mxu0 0
  %155 = vmatprep.mubr.bf16.mxu0 %v118
  %156 = vmatmul.mubr.bf16.gmra.mrb[0].mxu0 %v56
  %v157 = vpop.f32.mrb[0].mxu0
  %v158 = vadd.f32 %v42, %v157
  %v159 = vpop.f32.mrb[0].mxu0
  %v160 = vpop.f32.mrb[0].mxu0
  %v161 = vadd.f32 %v42, %v160
  %v162 = vpop.f32.mrb[0].mxu0
  %163 = vmatprep.mubr.bf16.mxu0 %v121
  %164 = vmatmul.mubr.bf16.gmra.mrb[0].mxu0 %v58
  %v165 = vpop.f32.mrb[0].mxu0
  %v166 = vadd.f32 %v42, %v165
  %v167 = vpop.f32.mrb[0].mxu0
  %v168 = vpop.f32.mrb[0].mxu0
  %v169 = vadd.f32 %v42, %v168
  %v170 = vpop.f32.mrb[0].mxu0
  %171 = vdwg.mxu0
  %v172 = vmax.f32 %v158, 0.0
  %v173 = vmax.f32 %v161, 0.0
  %v174 = vmax.f32 %v166, 0.0
  %v175 = vmax.f32 %v169, 0.0
  %v176 = vpack.c.bf16 %v173, %v172
  %v177 = vpack.c.bf16 %v175, %v174
  %v180 = vunpack.c.l.b16 %v176
  %v181 = vunpack.c.h.b16 %v176
  %v182 = vunpack.c.l.b16 %v177
  %v183 = vunpack.c.h.b16 %v177
  %v184 = vpack.c.b16 %v180, %v180
  %v185 = vpack.c.b16 %v181, %v181
  %v186 = vpack.c.b16 %v182, %v182
  %v187 = vpack.c.b16 %v183, %v183
  %vm192 = vcmask 257024
  %193 = vst.msk [vmem:[%s3] sm:$0xf] %vm192, %v184
  %194 = vst.msk [vmem:[%s3 + $0x4] sm:$0xf] %vm192, %v185
  %195 = vst.msk [vmem:[%s3 + $0x8] sm:$0xf] %vm192, %v186
  %196 = vst.msk [vmem:[%s3 + $0xc] sm:$0xf] %vm192, %v187
  // Predicated region
  $region14: #{conv_stem_forward.7} parent=0 // pred_check
    _
  $region15: #{conv_stem_forward.7} parent=0 // pred_check_branch
    %198 = sbr.rel (0) target = $region17
  $region16: #{conv_stem_forward.7} parent=0 // pred_region
    _
  $region17: #{conv_stem_forward.7} parent=0 // pred_fallthru
    _
  // Predicated region
  $region18: #{conv_stem_forward.7} parent=0 // pred_check
    _
  $region19: #{conv_stem_forward.7} parent=0 // pred_check_branch
    %200 = sbr.rel (0) target = $region21
  $region20: #{conv_stem_forward.7} parent=0 // pred_region
    _
  $region21: #{conv_stem_forward.7} parent=0 // pred_fallthru
    _

// kernel: conv_stem_forward.8
$region0: #{conv_stem_forward.8}
  #allocation0 [shape = 'u32[]', space=smem, size = 0x4, offset = 0x4, fixed_abs, tag = 'smem constant byte address 0x4 - core index']
  #allocation1 [shape = 'u32[144,128]{1,0:T(1,128)}', space=vmem, size = 0x12000, scoped, tag = 'internal scratch']
  %s0 = inlined_call_operand.vmem [shape: bf16[16,288], index: 0, kind: input, shape index: {}]
  %s1 = inlined_call_operand.vmem [shape: bf16[288,64], index: 1, kind: input, shape index: {}]
  %s2 = inlined_call_operand.vmem [shape: f32[1,64], index: 2, kind: input, shape index: {}]
  %s3 = inlined_call_operand.vmem [shape: bf16[16,64], index: 3, kind: output, shape index: {}]
  %s4 = sld [smem:[#allocation0]]
  $region22: #{conv_stem_forward.8} parent=0
    _
  %s6 = ssub.s32 1, %s4
  %s7 = scalar_select 0, %s6, %s4
  // Predicated region
  $region2: #{conv_stem_forward.8} parent=0 // pred_check
    _
  $region3: #{conv_stem_forward.8} parent=0 // pred_check_branch
    %9 = sbr.rel (0) target = $region5
  $region4: #{conv_stem_forward.8} parent=0 // pred_region
    _
  $region5: #{conv_stem_forward.8} parent=0 // pred_fallthru
    _
  // Predicated region
  $region6: #{conv_stem_forward.8} parent=0 // pred_check
    _
  $region7: #{conv_stem_forward.8} parent=0 // pred_check_branch
    %11 = sbr.rel (0) target = $region9
  $region8: #{conv_stem_forward.8} parent=0 // pred_region
    _
  $region9: #{conv_stem_forward.8} parent=0 // pred_fallthru
    _
  // Predicated region
  $region10: #{conv_stem_forward.8} parent=0 // pred_check
    _
  $region11: #{conv_stem_forward.8} parent=0 // pred_check_branch
    %13 = sbr.rel (0) target = $region13
  $region12: #{conv_stem_forward.8} parent=0 // pred_region
    _
  $region13: #{conv_stem_forward.8} parent=0 // pred_fallthru
    _
  %v15 = vld [vmem:[%s0] sm:$0xff]
  %v16 = vld [vmem:[%s0 + $0x8] sm:$0xf]
  %v17 = vld [vmem:[%s0 + $0xc] sm:$0xff]
  %v18 = vld [vmem:[%s0 + $0x14] sm:$0xf]
  %v19 = vld [vmem:[%s1] sm:$0xf]
  %v20 = vld [vmem:[%s1 + $0x4] sm:$0xf]
  %v21 = vld [vmem:[%s1 + $0x8] sm:$0xf]
  %v22 = vld [vmem:[%s1 + $0xc] sm:$0xf]
  %v23 = vld [vmem:[%s1 + $0x10] sm:$0xf]
  %v24 = vld [vmem:[%s1 + $0x14] sm:$0xf]
  %v25 = vld [vmem:[%s1 + $0x18] sm:$0xf]
  %v26 = vld [vmem:[%s1 + $0x1c] sm:$0xf]
  %v27 = vld [vmem:[%s1 + $0x20] sm:$0xf]
  %v28 = vld [vmem:[%s1 + $0x24] sm:$0xf]
  %v29 = vld [vmem:[%s1 + $0x28] sm:$0xf]
  %v30 = vld [vmem:[%s1 + $0x2c] sm:$0xf]
  %v31 = vld [vmem:[%s1 + $0x30] sm:$0xf]
  %v32 = vld [vmem:[%s1 + $0x34] sm:$0xf]
  %v33 = vld [vmem:[%s1 + $0x38] sm:$0xf]
  %v34 = vld [vmem:[%s1 + $0x3c] sm:$0xf]
  %v35 = vld [vmem:[%s1 + $0x40] sm:$0xf]
  %v36 = vld [vmem:[%s1 + $0x44] sm:$0xf]
  %v37 = vld [vmem:[%s1 + $0x48] sm:$0xf]
  %v38 = vld [vmem:[%s1 + $0x4c] sm:$0xf]
  %v39 = vld [vmem:[%s1 + $0x50] sm:$0xf]
  %v40 = vld [vmem:[%s1 + $0x54] sm:$0xf]
  %v41 = vld [vmem:[%s1 + $0x58] sm:$0xf]
  %v42 = vld [vmem:[%s1 + $0x5c] sm:$0xf]
  %v43 = vld [vmem:[%s1 + $0x60] sm:$0xf]
  %v44 = vld [vmem:[%s1 + $0x64] sm:$0xf]
  %v45 = vld [vmem:[%s1 + $0x68] sm:$0xf]
  %v46 = vld [vmem:[%s1 + $0x6c] sm:$0xf]
  %v47 = vld [vmem:[%s1 + $0x70] sm:$0xf]
  %v48 = vld [vmem:[%s1 + $0x74] sm:$0xf]
  %v49 = vld [vmem:[%s1 + $0x78] sm:$0xf]
  %v50 = vld [vmem:[%s1 + $0x7c] sm:$0xf]
  %v51 = vld [vmem:[%s1 + $0x80] sm:$0xf]
  %v52 = vld [vmem:[%s1 + $0x84] sm:$0xf]
  %v53 = vld [vmem:[%s1 + $0x88] sm:$0xf]
  %v54 = vld [vmem:[%s1 + $0x8c] sm:$0xf]
  %v55 = vld [vmem:[%s2] sm:$0x1]
  %v57 = vlaneseq
  %v58 = vshrl.u32 %v57, 7
  %v59 = vsub.s32 0, %v58
  %v60 = vrot.slane %v55, %v59
  %v66 = vunpack.c.l.b16 %v15
  %v67 = vunpack.c.h.b16 %v15
  %v68 = vunpack.c.l.b16 %v16
  %v69 = vunpack.c.l.b16 %v17
  %v70 = vunpack.c.h.b16 %v17
  %v71 = vunpack.c.l.b16 %v18
  %v72 = vpack.c.b16 %v69, %v66
  %v73 = vpack.c.b16 %v70, %v67
  %v74 = vpack.c.b16 %v71, %v68
  %v113 = vunpack.c.l.b16 %v19
  %v114 = vunpack.c.l.b16 %v20
  %v115 = vunpack.c.l.b16 %v21
  %v116 = vunpack.c.l.b16 %v22
  %v117 = vunpack.c.l.b16 %v23
  %v118 = vunpack.c.l.b16 %v24
  %v119 = vunpack.c.l.b16 %v25
  %v120 = vunpack.c.l.b16 %v26
  %v121 = vunpack.c.l.b16 %v27
  %v122 = vunpack.c.l.b16 %v28
  %v123 = vunpack.c.l.b16 %v29
  %v124 = vunpack.c.l.b16 %v30
  %v125 = vunpack.c.l.b16 %v31
  %v126 = vunpack.c.l.b16 %v32
  %v127 = vunpack.c.l.b16 %v33
  %v128 = vunpack.c.l.b16 %v34
  %v129 = vunpack.c.l.b16 %v35
  %v130 = vunpack.c.l.b16 %v36
  %v131 = vunpack.c.l.b16 %v37
  %v132 = vunpack.c.l.b16 %v38
  %v133 = vunpack.c.l.b16 %v39
  %v134 = vunpack.c.l.b16 %v40
  %v135 = vunpack.c.l.b16 %v41
  %v136 = vunpack.c.l.b16 %v42
  %v137 = vunpack.c.l.b16 %v43
  %v138 = vunpack.c.l.b16 %v44
  %v139 = vunpack.c.l.b16 %v45
  %v140 = vunpack.c.l.b16 %v46
  %v141 = vunpack.c.l.b16 %v47
  %v142 = vunpack.c.l.b16 %v48
  %v143 = vunpack.c.l.b16 %v49
  %v144 = vunpack.c.l.b16 %v50
  %v145 = vunpack.c.l.b16 %v51
  %v146 = vunpack.c.l.b16 %v52
  %v147 = vunpack.c.l.b16 %v53
  %v148 = vunpack.c.l.b16 %v54
  %v149 = vpack.c.b16 %v114, %v113
  %v150 = vpack.c.b16 %v116, %v115
  %v151 = vpack.c.b16 %v118, %v117
  %v152 = vpack.c.b16 %v120, %v119
  %v153 = vpack.c.b16 %v122, %v121
  %v154 = vpack.c.b16 %v124, %v123
  %v155 = vpack.c.b16 %v126, %v125
  %v156 = vpack.c.b16 %v128, %v127
  %v157 = vpack.c.b16 %v130, %v129
  %v158 = vpack.c.b16 %v132, %v131
  %v159 = vpack.c.b16 %v134, %v133
  %v160 = vpack.c.b16 %v136, %v135
  %v161 = vpack.c.b16 %v138, %v137
  %v162 = vpack.c.b16 %v140, %v139
  %v163 = vpack.c.b16 %v142, %v141
  %v164 = vpack.c.b16 %v144, %v143
  %v165 = vpack.c.b16 %v146, %v145
  %v166 = vpack.c.b16 %v148, %v147
  %vm185 = vcmask 261120
  %v187 = vsel %vm185, %v74, 0
  %189 = vmatprep.subr.bf16.mxu0 0
  %190 = vmatpush1.bf16.msra.mxu0 %v149
  %191 = vmatprep.subr.bf16.mxu0 0
  %192 = vmatpush1.bf16.msra.mxu0 %v150
  %193 = vmatprep.subr.bf16.mxu0 0
  %194 = vmatpush1.bf16.msra.mxu0 %v151
  %195 = vmatprep.subr.bf16.mxu0 0
  %196 = vmatpush1.bf16.msra.mxu0 %v152
  %197 = vmatprep.subr.bf16.mxu0 0
  %198 = vmatpush1.bf16.msra.mxu0 %v153
  %199 = vmatprep.subr.bf16.mxu0 0
  %200 = vmatpush1.bf16.msra.mxu0 %v154
  %201 = vmatprep.subr.bf16.mxu0 0
  %202 = vmatpush1.bf16.msra.mxu0 %v155
  %203 = vmatprep.subr.bf16.mxu0 0
  %204 = vmatpush1.bf16.msra.mxu0 %v156
  %205 = vmatprep.subr.bf16.mxu0 0
  %206 = vmatpush1.bf16.msra.mxu0 %v157
  %207 = vmatprep.subr.bf16.mxu0 0
  %208 = vmatpush1.bf16.msra.mxu0 %v158
  %209 = vmatprep.subr.bf16.mxu0 0
  %210 = vmatpush1.bf16.msra.mxu0 %v159
  %211 = vmatprep.subr.bf16.mxu0 0
  %212 = vmatpush1.bf16.msra.mxu0 %v160
  %213 = vmatprep.subr.bf16.mxu0 0
  %214 = vmatpush1.bf16.msra.mxu0 %v161
  %215 = vmatprep.subr.bf16.mxu0 0
  %216 = vmatpush1.bf16.msra.mxu0 %v162
  %217 = vmatprep.subr.bf16.mxu0 0
  %218 = vmatpush1.bf16.msra.mxu0 %v163
  %219 = vmatprep.subr.bf16.mxu0 0
  %220 = vmatpush1.bf16.msra.mxu0 %v164
  %221 = vmatprep.mubr.bf16.mxu0 %v73
  %222 = vmatmul.mubr.bf16.gmra.mrb[0].mxu0 %v72
  %v223 = vpop.f32.mrb[0].mxu0
  %v224 = vadd.f32 %v60, %v223
  %v225 = vpop.f32.mrb[0].mxu0
  %v226 = vpop.f32.mrb[0].mxu0
  %v227 = vadd.f32 %v60, %v226
  %v228 = vpop.f32.mrb[0].mxu0
  %229 = vdwg.mxu0
  %230 = vmatprep.subr.bf16.mxu0 0
  %231 = vmatpush1.bf16.msra.mxu0 %v165
  %232 = vmatprep.subr.bf16.mxu0 0
  %233 = vmatpush1.bf16.msra.mxu0 %v166
  %234 = vmatprep.subr.bf16.mxu0 0
  %235 = vmatpush1.bf16.msra.mxu0 0
  %236 = vmatprep.subr.bf16.mxu0 0
  %237 = vmatpush1.bf16.msra.mxu0 0
  %238 = vmatprep.subr.bf16.mxu0 0
  %239 = vmatpush1.bf16.msra.mxu0 0
  %240 = vmatprep.subr.bf16.mxu0 0
  %241 = vmatpush1.bf16.msra.mxu0 0
  %242 = vmatprep.subr.bf16.mxu0 0
  %243 = vmatpush1.bf16.msra.mxu0 0
  %244 = vmatprep.subr.bf16.mxu0 0
  %245 = vmatpush1.bf16.msra.mxu0 0
  %246 = vmatprep.subr.bf16.mxu0 0
  %247 = vmatpush1.bf16.msra.mxu0 0
  %248 = vmatprep.subr.bf16.mxu0 0
  %249 = vmatpush1.bf16.msra.mxu0 0
  %250 = vmatprep.subr.bf16.mxu0 0
  %251 = vmatpush1.bf16.msra.mxu0 0
  %252 = vmatprep.subr.bf16.mxu0 0
  %253 = vmatpush1.bf16.msra.mxu0 0
  %254 = vmatprep.subr.bf16.mxu0 0
  %255 = vmatpush1.bf16.msra.mxu0 0
  %256 = vmatprep.subr.bf16.mxu0 0
  %257 = vmatpush1.bf16.msra.mxu0 0
  %258 = vmatprep.subr.bf16.mxu0 0
  %259 = vmatpush1.bf16.msra.mxu0 0
  %260 = vmatprep.subr.bf16.mxu0 0
  %261 = vmatpush1.bf16.msra.mxu0 0
  %262 = vmatprep.mubr.bf16.mxu0 0
  %263 = vmatmul.mubr.bf16.gmra.mrb[0].mxu0 %v187
  %v264 = vpop.f32.mrb[0].mxu0
  %v265 = vadd.f32 %v224, %v264
  %v266 = vpop.f32.mrb[0].mxu0
  %v267 = vpop.f32.mrb[0].mxu0
  %v268 = vadd.f32 %v227, %v267
  %v269 = vpop.f32.mrb[0].mxu0
  %270 = vdwg.mxu0
  %v271 = vmax.f32 %v265, 0.0
  %v272 = vmax.f32 %v268, 0.0
  %v273 = vpack.c.bf16 %v272, %v271
  %v275 = vunpack.c.l.b16 %v273
  %v276 = vunpack.c.h.b16 %v273
  %v277 = vpack.c.b16 %v275, %v275
  %v278 = vpack.c.b16 %v276, %v276
  %vm281 = vcmask 519168
  %282 = vst.msk [vmem:[%s3] sm:$0xf] %vm281, %v277
  %283 = vst.msk [vmem:[%s3 + $0x4] sm:$0xf] %vm281, %v278
  // Predicated region
  $region14: #{conv_stem_forward.8} parent=0 // pred_check
    _
  $region15: #{conv_stem_forward.8} parent=0 // pred_check_branch
    %285 = sbr.rel (0) target = $region17
  $region16: #{conv_stem_forward.8} parent=0 // pred_region
    _
  $region17: #{conv_stem_forward.8} parent=0 // pred_fallthru
    _
  // Predicated region
  $region18: #{conv_stem_forward.8} parent=0 // pred_check
    _
  $region19: #{conv_stem_forward.8} parent=0 // pred_check_branch
    %287 = sbr.rel (0) target = $region21
  $region20: #{conv_stem_forward.8} parent=0 // pred_region
    _
  $region21: #{conv_stem_forward.8} parent=0 // pred_fallthru
    _

// kernel: conv_stem_forward.9
$region0: #{conv_stem_forward.9}
  #allocation0 [shape = 'u32[]', space=smem, size = 0x4, offset = 0x4, fixed_abs, tag = 'smem constant byte address 0x4 - core index']
  #allocation1 [shape = 'u32[144,128]{1,0:T(1,128)}', space=vmem, size = 0x12000, scoped, tag = 'internal scratch']
  %s0 = inlined_call_operand.vmem [shape: bf16[16,64], index: 0, kind: input, shape index: {}]
  %s1 = inlined_call_operand.vmem [shape: bf16[64,64], index: 1, kind: input, shape index: {}]
  %s2 = inlined_call_operand.vmem [shape: f32[1,64], index: 2, kind: input, shape index: {}]
  %s3 = inlined_call_operand.vmem [shape: f32[16,64], index: 3, kind: output, shape index: {}]
  %s4 = sld [smem:[#allocation0]]
  $region22: #{conv_stem_forward.9} parent=0
    _
  %s6 = ssub.s32 1, %s4
  %s7 = scalar_select 0, %s6, %s4
  // Predicated region
  $region2: #{conv_stem_forward.9} parent=0 // pred_check
    _
  $region3: #{conv_stem_forward.9} parent=0 // pred_check_branch
    %9 = sbr.rel (0) target = $region5
  $region4: #{conv_stem_forward.9} parent=0 // pred_region
    _
  $region5: #{conv_stem_forward.9} parent=0 // pred_fallthru
    _
  // Predicated region
  $region6: #{conv_stem_forward.9} parent=0 // pred_check
    _
  $region7: #{conv_stem_forward.9} parent=0 // pred_check_branch
    %11 = sbr.rel (0) target = $region9
  $region8: #{conv_stem_forward.9} parent=0 // pred_region
    _
  $region9: #{conv_stem_forward.9} parent=0 // pred_fallthru
    _
  // Predicated region
  $region10: #{conv_stem_forward.9} parent=0 // pred_check
    _
  $region11: #{conv_stem_forward.9} parent=0 // pred_check_branch
    %13 = sbr.rel (0) target = $region13
  $region12: #{conv_stem_forward.9} parent=0 // pred_region
    _
  $region13: #{conv_stem_forward.9} parent=0 // pred_fallthru
    _
  %v15 = vld [vmem:[%s0] sm:$0xf]
  %v16 = vld [vmem:[%s0 + $0x4] sm:$0xf]
  %v17 = vld [vmem:[%s1] sm:$0xf]
  %v18 = vld [vmem:[%s1 + $0x4] sm:$0xf]
  %v19 = vld [vmem:[%s1 + $0x8] sm:$0xf]
  %v20 = vld [vmem:[%s1 + $0xc] sm:$0xf]
  %v21 = vld [vmem:[%s1 + $0x10] sm:$0xf]
  %v22 = vld [vmem:[%s1 + $0x14] sm:$0xf]
  %v23 = vld [vmem:[%s1 + $0x18] sm:$0xf]
  %v24 = vld [vmem:[%s1 + $0x1c] sm:$0xf]
  %v25 = vld [vmem:[%s2] sm:$0x1]
  %v27 = vlaneseq
  %v28 = vshrl.u32 %v27, 7
  %v29 = vsub.s32 0, %v28
  %v30 = vrot.slane %v25, %v29
  %v34 = vunpack.c.l.b16 %v15
  %v35 = vunpack.c.l.b16 %v16
  %v36 = vpack.c.b16 %v35, %v34
  %v45 = vunpack.c.l.b16 %v17
  %v46 = vunpack.c.l.b16 %v18
  %v47 = vunpack.c.l.b16 %v19
  %v48 = vunpack.c.l.b16 %v20
  %v49 = vunpack.c.l.b16 %v21
  %v50 = vunpack.c.l.b16 %v22
  %v51 = vunpack.c.l.b16 %v23
  %v52 = vunpack.c.l.b16 %v24
  %v53 = vpack.c.b16 %v46, %v45
  %v54 = vpack.c.b16 %v48, %v47
  %v55 = vpack.c.b16 %v50, %v49
  %v56 = vpack.c.b16 %v52, %v51
  %vm61 = vcmask 523264
  %v63 = vsel %vm61, %v36, 0
  %65 = vmatprep.subr.bf16.mxu0 0
  %66 = vmatpush1.bf16.msra.mxu0 %v53
  %67 = vmatprep.subr.bf16.mxu0 0
  %68 = vmatpush1.bf16.msra.mxu0 %v54
  %69 = vmatprep.subr.bf16.mxu0 0
  %70 = vmatpush1.bf16.msra.mxu0 %v55
  %71 = vmatprep.subr.bf16.mxu0 0
  %72 = vmatpush1.bf16.msra.mxu0 %v56
  %73 = vmatprep.subr.bf16.mxu0 0
  %74 = vmatpush1.bf16.msra.mxu0 0
  %75 = vmatprep.subr.bf16.mxu0 0
  %76 = vmatpush1.bf16.msra.mxu0 0
  %77 = vmatprep.subr.bf16.mxu0 0
  %78 = vmatpush1.bf16.msra.mxu0 0
  %79 = vmatprep.subr.bf16.mxu0 0
  %80 = vmatpush1.bf16.msra.mxu0 0
  %81 = vmatprep.subr.bf16.mxu0 0
  %82 = vmatpush1.bf16.msra.mxu0 0
  %83 = vmatprep.subr.bf16.mxu0 0
  %84 = vmatpush1.bf16.msra.mxu0 0
  %85 = vmatprep.subr.bf16.mxu0 0
  %86 = vmatpush1.bf16.msra.mxu0 0
  %87 = vmatprep.subr.bf16.mxu0 0
  %88 = vmatpush1.bf16.msra.mxu0 0
  %89 = vmatprep.subr.bf16.mxu0 0
  %90 = vmatpush1.bf16.msra.mxu0 0
  %91 = vmatprep.subr.bf16.mxu0 0
  %92 = vmatpush1.bf16.msra.mxu0 0
  %93 = vmatprep.subr.bf16.mxu0 0
  %94 = vmatpush1.bf16.msra.mxu0 0
  %95 = vmatprep.subr.bf16.mxu0 0
  %96 = vmatpush1.bf16.msra.mxu0 0
  %97 = vmatprep.mubr.bf16.mxu0 0
  %98 = vmatmul.mubr.bf16.gmra.mrb[0].mxu0 %v63
  %v99 = vpop.f32.mrb[0].mxu0
  %v100 = vadd.f32 %v30, %v99
  %v101 = vpop.f32.mrb[0].mxu0
  %v102 = vpop.f32.mrb[0].mxu0
  %v103 = vadd.f32 %v30, %v102
  %v104 = vpop.f32.mrb[0].mxu0
  %105 = vdwg.mxu0
  %106 = vst.msk [vmem:[%s3] sm:$0xff] %vm61, %v100
  %107 = vst.msk [vmem:[%s3 + $0x8] sm:$0xff] %vm61, %v103
  // Predicated region
  $region14: #{conv_stem_forward.9} parent=0 // pred_check
    _
  $region15: #{conv_stem_forward.9} parent=0 // pred_check_branch
    %109 = sbr.rel (0) target = $region17
  $region16: #{conv_stem_forward.9} parent=0 // pred_region
    _
  $region17: #{conv_stem_forward.9} parent=0 // pred_fallthru
    _
  // Predicated region
  $region18: #{conv_stem_forward.9} parent=0 // pred_check
    _
  $region19: #{conv_stem_forward.9} parent=0 // pred_check_branch
    %111 = sbr.rel (0) target = $region21
  $region20: #{conv_stem_forward.9} parent=0 // pred_region
    _
  $region21: #{conv_stem_forward.9} parent=0 // pred_fallthru
    _

</llo_original>
